<compile_context>
chip_gen: v5e
topology: v5e:2x2
jax: 0.10.0
libtpu: 0.0.40
codegen_flags: <defaults>
</compile_context>

<pallas_src>
import functools

import jax
import jax.numpy as jnp
from jax import lax
from jax.experimental import pallas as pl
from jax.experimental.pallas import tpu as pltpu


# ---------------------------------------------------------------------------
# Fused kernel: 1x1 conv (+b1)  ->  depthwise KxK conv (+b2) + ReLU
# (BN scales are pre-folded into w1 / w2 on the host.)
# ---------------------------------------------------------------------------
def _lightconv_kernel(x_ref, w1_ref, b1_ref, w2_ref, b2_ref, o_ref, upad_ref,
                      *, K, pad, H, W, row_block):
    C1 = x_ref.shape[-1]
    C2 = o_ref.shape[-1]
    Hp = H + 2 * pad
    Wp = W + 2 * pad

    # ---- conv1: 1x1 conv as an MXU matmul (bf16 operands, f32 accumulation) -------
    x2d = x_ref[...].reshape(H * W, C1).astype(w1_ref.dtype)
    u = jnp.dot(x2d, w1_ref[...], preferred_element_type=jnp.float32)
    u = u + b1_ref[...]                                   # BN1 scale folded into w1
    u4 = u.reshape(1, H, W, C2)

    # ---- 'same' zero padding built in VMEM ----------------------------------------
    # Border rows are written directly (tiny, aligned dim-1 stores); only the W-padding
    # needs a small concatenate (sublane-offset placement), stored once with the
    # interior as a full-width aligned store.
    if pad > 0:
        zrow = jnp.zeros((1, pad, Wp, C2), jnp.float32)
        upad_ref[:, 0:pad, :, :] = zrow                    # top border rows
        upad_ref[:, pad + H:Hp, :, :] = zrow               # bottom border rows
        zcol = jnp.zeros((1, H, pad, C2), jnp.float32)
        u_wpad = jnp.concatenate([zcol, u4, zcol], axis=2)  # (1, H, Wp, C2)
        upad_ref[:, pad:pad + H, :, :] = u_wpad            # interior + W borders
    else:
        upad_ref[...] = u4

    # ---- conv2: depthwise KxK, row-blocked shift-and-accumulate + ReLU -------------
    # Hoist the per-tap weight broadcasts out of the unrolled loops (JAX does not CSE
    # broadcast_in_dim).
    w2 = w2_ref[...]                                       # (K*K, C2), BN2 scale folded
    taps = [w2[t].reshape(1, 1, 1, C2) for t in range(K * K)]
    b2v = b2_ref[...].reshape(1, 1, 1, C2)

    n_row_blocks = H // row_block
    for i in range(n_row_blocks):                          # == fori_loop(unroll=True)
        r0 = i * row_block
        # acc (1, row_block, W, C2) stays live across all K*K taps; initialised with
        # the folded BN2 shift so no separate bias add is needed.
        acc = jnp.broadcast_to(b2v, (1, row_block, W, C2))
        for kx in range(K):
            for ky in range(K):
                rows = upad_ref[:, r0 + ky:r0 + ky + row_block, kx:kx + W, :]
                acc = acc + rows * taps[ky * K + kx]
        o_ref[:, r0:r0 + row_block, :, :] = jnp.maximum(acc, 0.0).astype(o_ref.dtype)


# ---------------------------------------------------------------------------
# VMEM budget computed from the actual block sizes (review: don't hard-code 32 MiB)
# ---------------------------------------------------------------------------
def _vmem_limit_bytes(H, W, C1, C2, K, w1_itemsize):
    pad = K // 2
    in_blk = H * W * C1 * 4                                # x block (f32 in HBM)
    out_blk = H * W * C2 * 4
    scratch = (H + 2 * pad) * (W + 2 * pad) * C2 * 4
    par = C1 * C2 * w1_itemsize + (K * K + 2) * C2 * 4
    need = 2 * (in_blk + out_blk + par) + scratch          # double-buffered in/out/params
    need = int(need * 1.5) + (1 << 20)                     # headroom for compiler scratch
    return max(32 << 20, min(need, 100 << 20))


# ---------------------------------------------------------------------------
# NHWC-native forward (preferred TPU path: no layout transposes at the boundary)
# ---------------------------------------------------------------------------
@functools.partial(jax.jit, static_argnames=("K", "matmul_dtype"))
def lightconv_forward(x_nhwc, params, K, matmul_dtype=jnp.bfloat16):
    N, H, W, C1 = x_nhwc.shape
    C2 = params["w1"].shape[1]
    pad = K // 2
    # Lane-dense output requires C2 % 128 == 0 (demo uses 128); C1 < 128 under-fills
    # the MXU contraction width but is tolerated.
    row_block = 8 if H % 8 == 0 else H

    w1 = params["w1"].astype(matmul_dtype)                 # BN1 scale already folded in
    w1_bytes = jnp.dtype(matmul_dtype).itemsize

    flops = N * H * W * C2 * (2 * C1 + 2 * K * K + 2)
    bytes_accessed = (4 * N * H * W * (C1 + C2)
                      + w1_bytes * C1 * C2 + 4 * (K * K + 2) * C2)

    return pl.pallas_call(
        functools.partial(_lightconv_kernel, K=K, pad=pad, H=H, W=W,
                          row_block=row_block),
        out_shape=jax.ShapeDtypeStruct((N, H, W, C2), jnp.float32),
        grid=(N,),
        in_specs=[
            pl.BlockSpec((1, H, W, C1), lambda n: (n, 0, 0, 0)),
            pl.BlockSpec((C1, C2), lambda n: (0, 0)),
            pl.BlockSpec((1, C2), lambda n: (0, 0)),
            pl.BlockSpec((K * K, C2), lambda n: (0, 0)),
            pl.BlockSpec((1, C2), lambda n: (0, 0)),
        ],
        out_specs=pl.BlockSpec((1, H, W, C2), lambda n: (n, 0, 0, 0)),
        scratch_shapes=[pltpu.VMEM((1, H + 2 * pad, W + 2 * pad, C2), jnp.float32)],
        compiler_params=pltpu.CompilerParams(
            dimension_semantics=("parallel",),
            vmem_limit_bytes=_vmem_limit_bytes(H, W, C1, C2, K, w1_bytes)),
        cost_estimate=pl.CostEstimate(
            flops=flops, transcendentals=0, bytes_accessed=bytes_accessed),
    )(x_nhwc, w1, params["b1"], params["w2"], params["b2"])


def lightconv_forward_nchw(x_nchw, params, K, matmul_dtype=jnp.bfloat16):
    """Parity adapter for the PyTorch NCHW interface.

    NOTE: each transpose below is a full extra HBM pass over the activations — prefer
    keeping the surrounding model NHWC and calling lightconv_forward directly.
    """
    x = jnp.transpose(x_nchw, (0, 2, 3, 1))
    y = lightconv_forward(x, params, K=K, matmul_dtype=matmul_dtype)
    return jnp.transpose(y, (0, 3, 1, 2))


# ---------------------------------------------------------------------------
# Deterministic synthetic parameters (eval-mode BN folded into the conv weights)
# ---------------------------------------------------------------------------
def init_params(key, C1, C2, K, eps=1e-5):
    keys = jax.random.split(key, 10)

    def rnd(k, shape, scale=0.1):
        return scale * jax.random.normal(k, shape, jnp.float32)

    # conv1.weight (C2,C1,1,1) -> (C1,C2);  conv2.weight (C2,1,K,K) -> (K*K,C2),
    # tap row index = ky*K + kx.
    w1 = rnd(keys[0], (C1, C2))
    w2 = rnd(keys[1], (K * K, C2))

    def bn_fold(kg, kb, km, kv):
        gamma = 1.0 + rnd(kg, (C2,))
        beta = rnd(kb, (C2,), 0.05)
        mean = rnd(km, (C2,), 0.05)
        var = jnp.abs(rnd(kv, (C2,), 0.5)) + 0.5
        scale = gamma * lax.rsqrt(var + eps)
        shift = beta - mean * scale
        return scale, shift

    s1, b1 = bn_fold(keys[2], keys[3], keys[4], keys[5])
    s2, b2 = bn_fold(keys[6], keys[7], keys[8], keys[9])
    # Fold the BN scales into the conv weights (parameter-only work).
    return {"w1": w1 * s1[None, :], "b1": b1.reshape(1, C2),
            "w2": w2 * s2[None, :], "b2": b2.reshape(1, C2)}


# ---------------------------------------------------------------------------
# Pure-JAX NHWC reference (mirrors the PyTorch forward) for correctness checks
# ---------------------------------------------------------------------------
def lightconv_reference_nhwc(x_nhwc, p, K):
    C2 = p["w1"].shape[1]
    pad = K // 2
    u = jnp.einsum("nhwc,cd->nhwd", x_nhwc, p["w1"]) + p["b1"]
    rhs = p["w2"].reshape(K, K, 1, C2)
    y = lax.conv_general_dilated(
        u, rhs, window_strides=(1, 1), padding=((pad, pad), (pad, pad)),
        dimension_numbers=("NHWC", "HWIO", "NHWC"), feature_group_count=C2)
    return jnp.maximum(y + p["b2"], 0.0)


if __name__ == "__main__":
    key = jax.random.PRNGKey(0)
    # Small demo shapes; C2 = 128 keeps the output last dim lane-dense.
    N, C1, C2, H, W = 2, 64, 128, 16, 16

    for K in (3, 5):                       # LightConv kernel sizes used by HGBlock
        kx_, kp_ = jax.random.split(jax.random.fold_in(key, K))
        x_nhwc = jax.random.normal(kx_, (N, H, W, C1), jnp.float32)
        params = init_params(kp_, C1, C2, K)

        ref = jax.block_until_ready(lightconv_reference_nhwc(x_nhwc, params, K))

        # Exact-path check (f32 MXU matmul).
        out32 = jax.block_until_ready(
            lightconv_forward(x_nhwc, params, K=K, matmul_dtype=jnp.float32))
        assert out32.shape == (N, H, W, C2)
        err32 = float(jnp.max(jnp.abs(out32 - ref)))
        if not err32 < 2e-3:
            raise AssertionError(f"K={K} f32 path mismatch, max abs err = {err32}")

        # Default perf path (bf16 MXU operands, f32 accumulation): looser tolerance.
        out16 = jax.block_until_ready(
            lightconv_forward(x_nhwc, params, K=K, matmul_dtype=jnp.bfloat16))
        err16 = float(jnp.max(jnp.abs(out16 - ref)))
        if not err16 < 5e-2:
            raise AssertionError(f"K={K} bf16 path mismatch, max abs err = {err16}")

        # NCHW adapter parity (matches the PyTorch module's layout).
        x_nchw = jnp.transpose(x_nhwc, (0, 3, 1, 2))
        out_nchw = jax.block_until_ready(
            lightconv_forward_nchw(x_nchw, params, K=K, matmul_dtype=jnp.bfloat16))
        assert out_nchw.shape == (N, C2, H, W)
        errp = float(jnp.max(jnp.abs(out_nchw - jnp.transpose(out16, (0, 3, 1, 2)))))
        if not errp < 1e-5:
            raise AssertionError(f"K={K} NCHW adapter mismatch, max abs err = {errp}")

    print("KERNEL_OK")
</pallas_src>

<mosaic_0001>
module attributes {stable_mosaic.version = 11 : i64} {
  func.func @_lightconv_kernel(%arg0: i32, %arg1: memref<1x16x16x64xf32, #tpu.memory_space<vmem>>, %arg2: memref<64x128xf32, #tpu.memory_space<vmem>>, %arg3: memref<1x128xf32, #tpu.memory_space<vmem>>, %arg4: memref<9x128xf32, #tpu.memory_space<vmem>>, %arg5: memref<1x128xf32, #tpu.memory_space<vmem>>, %arg6: memref<1x16x16x128xf32, #tpu.memory_space<vmem>>, %arg7: memref<1x18x18x128xf32, #tpu.memory_space<vmem>>) attributes {dimension_semantics = [#tpu.dimension_semantics<parallel>], iteration_bounds = array<i64: 2>, scalar_prefetch = 0 : i64, scratch_operands = 1 : i64, tpu.core_type = #tpu.core_type<tc>, window_params = [{transform_indices = @transform_0, window_bounds = array<i64: 1, 16, 16, 64>}, {pipeline_mode = #tpu.pipeline_mode<synchronous>, transform_indices = @transform_1, window_bounds = array<i64: 64, 128>}, {pipeline_mode = #tpu.pipeline_mode<synchronous>, transform_indices = @transform_2, window_bounds = array<i64: 1, 128>}, {pipeline_mode = #tpu.pipeline_mode<synchronous>, transform_indices = @transform_3, window_bounds = array<i64: 9, 128>}, {pipeline_mode = #tpu.pipeline_mode<synchronous>, transform_indices = @transform_4, window_bounds = array<i64: 1, 128>}, {transform_indices = @transform_5, window_bounds = array<i64: 1, 16, 16, 128>}]} {
    %c0 = arith.constant 0 : index
    %c0_0 = arith.constant 0 : index
    %c0_1 = arith.constant 0 : index
    %c0_2 = arith.constant 0 : index
    %0 = vector.load %arg1[%c0, %c0_0, %c0_1, %c0_2] : memref<1x16x16x64xf32, #tpu.memory_space<vmem>>, vector<1x16x16x64xf32>
    %1 = vector.shape_cast %0 : vector<1x16x16x64xf32> to vector<256x64xf32>
    %c0_3 = arith.constant 0 : index
    %c0_4 = arith.constant 0 : index
    %2 = vector.load %arg2[%c0_3, %c0_4] : memref<64x128xf32, #tpu.memory_space<vmem>>, vector<64x128xf32>
    %cst = arith.constant dense<0.000000e+00> : vector<256x128xf32>
    %3 = tpu.matmul %1, %2, %cst {dimension_numbers = #tpu.dot_dimension_numbers<[1], [0], [0], [1], [0, 0, 1, 1], [], []>} : vector<256x64xf32>, vector<64x128xf32>, vector<256x128xf32> -> vector<256x128xf32>
    %c0_5 = arith.constant 0 : index
    %c0_6 = arith.constant 0 : index
    %4 = vector.load %arg3[%c0_5, %c0_6] : memref<1x128xf32, #tpu.memory_space<vmem>>, vector<1x128xf32>
    %5 = vector.broadcast %4 : vector<1x128xf32> to vector<256x128xf32>
    %6 = arith.addf %3, %5 : vector<256x128xf32>
    %7 = vector.shape_cast %6 : vector<256x128xf32> to vector<1x16x16x128xf32>
    %cst_7 = arith.constant 0.000000e+00 : f32
    %8 = vector.broadcast %cst_7 : f32 to vector<1x1x18x128xf32>
    %c0_8 = arith.constant 0 : index
    %c0_9 = arith.constant 0 : index
    %c0_10 = arith.constant 0 : index
    %c0_11 = arith.constant 0 : index
    %9 = vector.load %arg7[%c0_8, %c0_9, %c0_10, %c0_11] : memref<1x18x18x128xf32, #tpu.memory_space<vmem>>, vector<1x1x18x128xf32>
    tpu.vector_store %arg7[%c0_8, %c0_9, %c0_10, %c0_11], %8 {strides = array<i32>} : memref<1x18x18x128xf32, #tpu.memory_space<vmem>>, vector<1x1x18x128xf32>,
    %c0_12 = arith.constant 0 : index
    %c17 = arith.constant 17 : index
    %c0_13 = arith.constant 0 : index
    %c0_14 = arith.constant 0 : index
    %10 = vector.load %arg7[%c0_12, %c17, %c0_13, %c0_14] : memref<1x18x18x128xf32, #tpu.memory_space<vmem>>, vector<1x1x18x128xf32>
    tpu.vector_store %arg7[%c0_12, %c17, %c0_13, %c0_14], %8 {strides = array<i32>} : memref<1x18x18x128xf32, #tpu.memory_space<vmem>>, vector<1x1x18x128xf32>,
    %cst_15 = arith.constant 0.000000e+00 : f32
    %11 = vector.broadcast %cst_15 : f32 to vector<1x16x1x128xf32>
    %12 = tpu.concatenate %11, %7, %11 in 2 : vector<1x16x1x128xf32>, vector<1x16x16x128xf32>, vector<1x16x1x128xf32> -> vector<1x16x18x128xf32>
    %c0_16 = arith.constant 0 : index
    %c1 = arith.constant 1 : index
    %c0_17 = arith.constant 0 : index
    %c0_18 = arith.constant 0 : index
    %13 = vector.load %arg7[%c0_16, %c1, %c0_17, %c0_18] : memref<1x18x18x128xf32, #tpu.memory_space<vmem>>, vector<1x16x18x128xf32>
    tpu.vector_store %arg7[%c0_16, %c1, %c0_17, %c0_18], %12 {strides = array<i32>} : memref<1x18x18x128xf32, #tpu.memory_space<vmem>>, vector<1x16x18x128xf32>,
    %c0_19 = arith.constant 0 : index
    %c0_20 = arith.constant 0 : index
    %14 = vector.load %arg4[%c0_19, %c0_20] : memref<9x128xf32, #tpu.memory_space<vmem>>, vector<9x128xf32>
    %15 = vector.extract_strided_slice %14 {offsets = [0, 0], sizes = [1, 128], strides = [1, 1]} : vector<9x128xf32> to vector<1x128xf32>
    %16 = vector.shape_cast %15 : vector<1x128xf32> to vector<128xf32>
    %17 = vector.shape_cast %16 : vector<128xf32> to vector<1x1x1x128xf32>
    %18 = vector.extract_strided_slice %14 {offsets = [1, 0], sizes = [1, 128], strides = [1, 1]} : vector<9x128xf32> to vector<1x128xf32>
    %19 = vector.shape_cast %18 : vector<1x128xf32> to vector<128xf32>
    %20 = vector.shape_cast %19 : vector<128xf32> to vector<1x1x1x128xf32>
    %21 = vector.extract_strided_slice %14 {offsets = [2, 0], sizes = [1, 128], strides = [1, 1]} : vector<9x128xf32> to vector<1x128xf32>
    %22 = vector.shape_cast %21 : vector<1x128xf32> to vector<128xf32>
    %23 = vector.shape_cast %22 : vector<128xf32> to vector<1x1x1x128xf32>
    %24 = vector.extract_strided_slice %14 {offsets = [3, 0], sizes = [1, 128], strides = [1, 1]} : vector<9x128xf32> to vector<1x128xf32>
    %25 = vector.shape_cast %24 : vector<1x128xf32> to vector<128xf32>
    %26 = vector.shape_cast %25 : vector<128xf32> to vector<1x1x1x128xf32>
    %27 = vector.extract_strided_slice %14 {offsets = [4, 0], sizes = [1, 128], strides = [1, 1]} : vector<9x128xf32> to vector<1x128xf32>
    %28 = vector.shape_cast %27 : vector<1x128xf32> to vector<128xf32>
    %29 = vector.shape_cast %28 : vector<128xf32> to vector<1x1x1x128xf32>
    %30 = vector.extract_strided_slice %14 {offsets = [5, 0], sizes = [1, 128], strides = [1, 1]} : vector<9x128xf32> to vector<1x128xf32>
    %31 = vector.shape_cast %30 : vector<1x128xf32> to vector<128xf32>
    %32 = vector.shape_cast %31 : vector<128xf32> to vector<1x1x1x128xf32>
    %33 = vector.extract_strided_slice %14 {offsets = [6, 0], sizes = [1, 128], strides = [1, 1]} : vector<9x128xf32> to vector<1x128xf32>
    %34 = vector.shape_cast %33 : vector<1x128xf32> to vector<128xf32>
    %35 = vector.shape_cast %34 : vector<128xf32> to vector<1x1x1x128xf32>
    %36 = vector.extract_strided_slice %14 {offsets = [7, 0], sizes = [1, 128], strides = [1, 1]} : vector<9x128xf32> to vector<1x128xf32>
    %37 = vector.shape_cast %36 : vector<1x128xf32> to vector<128xf32>
    %38 = vector.shape_cast %37 : vector<128xf32> to vector<1x1x1x128xf32>
    %39 = vector.extract_strided_slice %14 {offsets = [8, 0], sizes = [1, 128], strides = [1, 1]} : vector<9x128xf32> to vector<1x128xf32>
    %40 = vector.shape_cast %39 : vector<1x128xf32> to vector<128xf32>
    %41 = vector.shape_cast %40 : vector<128xf32> to vector<1x1x1x128xf32>
    %c0_21 = arith.constant 0 : index
    %c0_22 = arith.constant 0 : index
    %42 = vector.load %arg5[%c0_21, %c0_22] : memref<1x128xf32, #tpu.memory_space<vmem>>, vector<1x128xf32>
    %43 = vector.shape_cast %42 : vector<1x128xf32> to vector<1x1x1x128xf32>
    %44 = vector.shape_cast %43 : vector<1x1x1x128xf32> to vector<1x1x1x128xf32>
    %45 = vector.broadcast %44 : vector<1x1x1x128xf32> to vector<1x8x16x128xf32>
    %c0_23 = arith.constant 0 : index
    %c0_24 = arith.constant 0 : index
    %c0_25 = arith.constant 0 : index
    %c0_26 = arith.constant 0 : index
    %46 = vector.load %arg7[%c0_23, %c0_24, %c0_25, %c0_26] : memref<1x18x18x128xf32, #tpu.memory_space<vmem>>, vector<1x8x16x128xf32>
    %47 = vector.broadcast %17 : vector<1x1x1x128xf32> to vector<1x8x16x128xf32>
    %48 = arith.mulf %46, %47 : vector<1x8x16x128xf32>
    %49 = arith.addf %45, %48 : vector<1x8x16x128xf32>
    %c0_27 = arith.constant 0 : index
    %c1_28 = arith.constant 1 : index
    %c0_29 = arith.constant 0 : index
    %c0_30 = arith.constant 0 : index
    %50 = vector.load %arg7[%c0_27, %c1_28, %c0_29, %c0_30] : memref<1x18x18x128xf32, #tpu.memory_space<vmem>>, vector<1x8x16x128xf32>
    %51 = vector.broadcast %26 : vector<1x1x1x128xf32> to vector<1x8x16x128xf32>
    %52 = arith.mulf %50, %51 : vector<1x8x16x128xf32>
    %53 = arith.addf %49, %52 : vector<1x8x16x128xf32>
    %c0_31 = arith.constant 0 : index
    %c2 = arith.constant 2 : index
    %c0_32 = arith.constant 0 : index
    %c0_33 = arith.constant 0 : index
    %54 = vector.load %arg7[%c0_31, %c2, %c0_32, %c0_33] : memref<1x18x18x128xf32, #tpu.memory_space<vmem>>, vector<1x8x16x128xf32>
    %55 = vector.broadcast %35 : vector<1x1x1x128xf32> to vector<1x8x16x128xf32>
    %56 = arith.mulf %54, %55 : vector<1x8x16x128xf32>
    %57 = arith.addf %53, %56 : vector<1x8x16x128xf32>
    %c0_34 = arith.constant 0 : index
    %c0_35 = arith.constant 0 : index
    %c1_36 = arith.constant 1 : index
    %c0_37 = arith.constant 0 : index
    %58 = vector.load %arg7[%c0_34, %c0_35, %c1_36, %c0_37] : memref<1x18x18x128xf32, #tpu.memory_space<vmem>>, vector<1x8x16x128xf32>
    %59 = vector.broadcast %20 : vector<1x1x1x128xf32> to vector<1x8x16x128xf32>
    %60 = arith.mulf %58, %59 : vector<1x8x16x128xf32>
    %61 = arith.addf %57, %60 : vector<1x8x16x128xf32>
    %c0_38 = arith.constant 0 : index
    %c1_39 = arith.constant 1 : index
    %c1_40 = arith.constant 1 : index
    %c0_41 = arith.constant 0 : index
    %62 = vector.load %arg7[%c0_38, %c1_39, %c1_40, %c0_41] : memref<1x18x18x128xf32, #tpu.memory_space<vmem>>, vector<1x8x16x128xf32>
    %63 = vector.broadcast %29 : vector<1x1x1x128xf32> to vector<1x8x16x128xf32>
    %64 = arith.mulf %62, %63 : vector<1x8x16x128xf32>
    %65 = arith.addf %61, %64 : vector<1x8x16x128xf32>
    %c0_42 = arith.constant 0 : index
    %c2_43 = arith.constant 2 : index
    %c1_44 = arith.constant 1 : index
    %c0_45 = arith.constant 0 : index
    %66 = vector.load %arg7[%c0_42, %c2_43, %c1_44, %c0_45] : memref<1x18x18x128xf32, #tpu.memory_space<vmem>>, vector<1x8x16x128xf32>
    %67 = vector.broadcast %38 : vector<1x1x1x128xf32> to vector<1x8x16x128xf32>
    %68 = arith.mulf %66, %67 : vector<1x8x16x128xf32>
    %69 = arith.addf %65, %68 : vector<1x8x16x128xf32>
    %c0_46 = arith.constant 0 : index
    %c0_47 = arith.constant 0 : index
    %c2_48 = arith.constant 2 : index
    %c0_49 = arith.constant 0 : index
    %70 = vector.load %arg7[%c0_46, %c0_47, %c2_48, %c0_49] : memref<1x18x18x128xf32, #tpu.memory_space<vmem>>, vector<1x8x16x128xf32>
    %71 = vector.broadcast %23 : vector<1x1x1x128xf32> to vector<1x8x16x128xf32>
    %72 = arith.mulf %70, %71 : vector<1x8x16x128xf32>
    %73 = arith.addf %69, %72 : vector<1x8x16x128xf32>
    %c0_50 = arith.constant 0 : index
    %c1_51 = arith.constant 1 : index
    %c2_52 = arith.constant 2 : index
    %c0_53 = arith.constant 0 : index
    %74 = vector.load %arg7[%c0_50, %c1_51, %c2_52, %c0_53] : memref<1x18x18x128xf32, #tpu.memory_space<vmem>>, vector<1x8x16x128xf32>
    %75 = vector.broadcast %32 : vector<1x1x1x128xf32> to vector<1x8x16x128xf32>
    %76 = arith.mulf %74, %75 : vector<1x8x16x128xf32>
    %77 = arith.addf %73, %76 : vector<1x8x16x128xf32>
    %c0_54 = arith.constant 0 : index
    %c2_55 = arith.constant 2 : index
    %c2_56 = arith.constant 2 : index
    %c0_57 = arith.constant 0 : index
    %78 = vector.load %arg7[%c0_54, %c2_55, %c2_56, %c0_57] : memref<1x18x18x128xf32, #tpu.memory_space<vmem>>, vector<1x8x16x128xf32>
    %79 = vector.broadcast %41 : vector<1x1x1x128xf32> to vector<1x8x16x128xf32>
    %80 = arith.mulf %78, %79 : vector<1x8x16x128xf32>
    %81 = arith.addf %77, %80 : vector<1x8x16x128xf32>
    %cst_58 = arith.constant 0.000000e+00 : f32
    %82 = vector.broadcast %cst_58 : f32 to vector<1x8x16x128xf32>
    %83 = arith.maximumf %81, %82 : vector<1x8x16x128xf32>
    %c0_59 = arith.constant 0 : index
    %c0_60 = arith.constant 0 : index
    %c0_61 = arith.constant 0 : index
    %c0_62 = arith.constant 0 : index
    %84 = vector.load %arg6[%c0_59, %c0_60, %c0_61, %c0_62] : memref<1x16x16x128xf32, #tpu.memory_space<vmem>>, vector<1x8x16x128xf32>
    tpu.vector_store %arg6[%c0_59, %c0_60, %c0_61, %c0_62], %83 {strides = array<i32>} : memref<1x16x16x128xf32, #tpu.memory_space<vmem>>, vector<1x8x16x128xf32>,
    %85 = vector.shape_cast %43 : vector<1x1x1x128xf32> to vector<1x1x1x128xf32>
    %86 = vector.broadcast %85 : vector<1x1x1x128xf32> to vector<1x8x16x128xf32>
    %c0_63 = arith.constant 0 : index
    %c8 = arith.constant 8 : index
    %c0_64 = arith.constant 0 : index
    %c0_65 = arith.constant 0 : index
    %87 = vector.load %arg7[%c0_63, %c8, %c0_64, %c0_65] : memref<1x18x18x128xf32, #tpu.memory_space<vmem>>, vector<1x8x16x128xf32>
    %88 = vector.broadcast %17 : vector<1x1x1x128xf32> to vector<1x8x16x128xf32>
    %89 = arith.mulf %87, %88 : vector<1x8x16x128xf32>
    %90 = arith.addf %86, %89 : vector<1x8x16x128xf32>
    %c0_66 = arith.constant 0 : index
    %c9 = arith.constant 9 : index
    %c0_67 = arith.constant 0 : index
    %c0_68 = arith.constant 0 : index
    %91 = vector.load %arg7[%c0_66, %c9, %c0_67, %c0_68] : memref<1x18x18x128xf32, #tpu.memory_space<vmem>>, vector<1x8x16x128xf32>
    %92 = vector.broadcast %26 : vector<1x1x1x128xf32> to vector<1x8x16x128xf32>
    %93 = arith.mulf %91, %92 : vector<1x8x16x128xf32>
    %94 = arith.addf %90, %93 : vector<1x8x16x128xf32>
    %c0_69 = arith.constant 0 : index
    %c10 = arith.constant 10 : index
    %c0_70 = arith.constant 0 : index
    %c0_71 = arith.constant 0 : index
    %95 = vector.load %arg7[%c0_69, %c10, %c0_70, %c0_71] : memref<1x18x18x128xf32, #tpu.memory_space<vmem>>, vector<1x8x16x128xf32>
    %96 = vector.broadcast %35 : vector<1x1x1x128xf32> to vector<1x8x16x128xf32>
    %97 = arith.mulf %95, %96 : vector<1x8x16x128xf32>
    %98 = arith.addf %94, %97 : vector<1x8x16x128xf32>
    %c0_72 = arith.constant 0 : index
    %c8_73 = arith.constant 8 : index
    %c1_74 = arith.constant 1 : index
    %c0_75 = arith.constant 0 : index
    %99 = vector.load %arg7[%c0_72, %c8_73, %c1_74, %c0_75] : memref<1x18x18x128xf32, #tpu.memory_space<vmem>>, vector<1x8x16x128xf32>
    %100 = vector.broadcast %20 : vector<1x1x1x128xf32> to vector<1x8x16x128xf32>
    %101 = arith.mulf %99, %100 : vector<1x8x16x128xf32>
    %102 = arith.addf %98, %101 : vector<1x8x16x128xf32>
    %c0_76 = arith.constant 0 : index
    %c9_77 = arith.constant 9 : index
    %c1_78 = arith.constant 1 : index
    %c0_79 = arith.constant 0 : index
    %103 = vector.load %arg7[%c0_76, %c9_77, %c1_78, %c0_79] : memref<1x18x18x128xf32, #tpu.memory_space<vmem>>, vector<1x8x16x128xf32>
    %104 = vector.broadcast %29 : vector<1x1x1x128xf32> to vector<1x8x16x128xf32>
    %105 = arith.mulf %103, %104 : vector<1x8x16x128xf32>
    %106 = arith.addf %102, %105 : vector<1x8x16x128xf32>
    %c0_80 = arith.constant 0 : index
    %c10_81 = arith.constant 10 : index
    %c1_82 = arith.constant 1 : index
    %c0_83 = arith.constant 0 : index
    %107 = vector.load %arg7[%c0_80, %c10_81, %c1_82, %c0_83] : memref<1x18x18x128xf32, #tpu.memory_space<vmem>>, vector<1x8x16x128xf32>
    %108 = vector.broadcast %38 : vector<1x1x1x128xf32> to vector<1x8x16x128xf32>
    %109 = arith.mulf %107, %108 : vector<1x8x16x128xf32>
    %110 = arith.addf %106, %109 : vector<1x8x16x128xf32>
    %c0_84 = arith.constant 0 : index
    %c8_85 = arith.constant 8 : index
    %c2_86 = arith.constant 2 : index
    %c0_87 = arith.constant 0 : index
    %111 = vector.load %arg7[%c0_84, %c8_85, %c2_86, %c0_87] : memref<1x18x18x128xf32, #tpu.memory_space<vmem>>, vector<1x8x16x128xf32>
    %112 = vector.broadcast %23 : vector<1x1x1x128xf32> to vector<1x8x16x128xf32>
    %113 = arith.mulf %111, %112 : vector<1x8x16x128xf32>
    %114 = arith.addf %110, %113 : vector<1x8x16x128xf32>
    %c0_88 = arith.constant 0 : index
    %c9_89 = arith.constant 9 : index
    %c2_90 = arith.constant 2 : index
    %c0_91 = arith.constant 0 : index
    %115 = vector.load %arg7[%c0_88, %c9_89, %c2_90, %c0_91] : memref<1x18x18x128xf32, #tpu.memory_space<vmem>>, vector<1x8x16x128xf32>
    %116 = vector.broadcast %32 : vector<1x1x1x128xf32> to vector<1x8x16x128xf32>
    %117 = arith.mulf %115, %116 : vector<1x8x16x128xf32>
    %118 = arith.addf %114, %117 : vector<1x8x16x128xf32>
    %c0_92 = arith.constant 0 : index
    %c10_93 = arith.constant 10 : index
    %c2_94 = arith.constant 2 : index
    %c0_95 = arith.constant 0 : index
    %119 = vector.load %arg7[%c0_92, %c10_93, %c2_94, %c0_95] : memref<1x18x18x128xf32, #tpu.memory_space<vmem>>, vector<1x8x16x128xf32>
    %120 = vector.broadcast %41 : vector<1x1x1x128xf32> to vector<1x8x16x128xf32>
    %121 = arith.mulf %119, %120 : vector<1x8x16x128xf32>
    %122 = arith.addf %118, %121 : vector<1x8x16x128xf32>
    %cst_96 = arith.constant 0.000000e+00 : f32
    %123 = vector.broadcast %cst_96 : f32 to vector<1x8x16x128xf32>
    %124 = arith.maximumf %122, %123 : vector<1x8x16x128xf32>
    %c0_97 = arith.constant 0 : index
    %c8_98 = arith.constant 8 : index
    %c0_99 = arith.constant 0 : index
    %c0_100 = arith.constant 0 : index
    %125 = vector.load %arg6[%c0_97, %c8_98, %c0_99, %c0_100] : memref<1x16x16x128xf32, #tpu.memory_space<vmem>>, vector<1x8x16x128xf32>
    tpu.vector_store %arg6[%c0_97, %c8_98, %c0_99, %c0_100], %124 {strides = array<i32>} : memref<1x16x16x128xf32, #tpu.memory_space<vmem>>, vector<1x8x16x128xf32>,
    return
  }
  func.func @transform_0(%arg0: i32) -> (i32, i32, i32, i32) {
    %c0_i32 = arith.constant 0 : i32
    %c0_i32_0 = arith.constant 0 : i32
    %c0_i32_1 = arith.constant 0 : i32
    %c0_i32_2 = arith.constant 0 : i32
    return %arg0, %c0_i32, %c0_i32_0, %c0_i32_1 : i32, i32, i32, i32
  }
  func.func @transform_1(%arg0: i32) -> (i32, i32) {
    %c0_i32 = arith.constant 0 : i32
    %c0_i32_0 = arith.constant 0 : i32
    %c0_i32_1 = arith.constant 0 : i32
    return %c0_i32, %c0_i32_0 : i32, i32
  }
  func.func @transform_2(%arg0: i32) -> (i32, i32) {
    %c0_i32 = arith.constant 0 : i32
    %c0_i32_0 = arith.constant 0 : i32
    %c0_i32_1 = arith.constant 0 : i32
    return %c0_i32, %c0_i32_0 : i32, i32
  }
  func.func @transform_3(%arg0: i32) -> (i32, i32) {
    %c0_i32 = arith.constant 0 : i32
    %c0_i32_0 = arith.constant 0 : i32
    %c0_i32_1 = arith.constant 0 : i32
    return %c0_i32, %c0_i32_0 : i32, i32
  }
  func.func @transform_4(%arg0: i32) -> (i32, i32) {
    %c0_i32 = arith.constant 0 : i32
    %c0_i32_0 = arith.constant 0 : i32
    %c0_i32_1 = arith.constant 0 : i32
    return %c0_i32, %c0_i32_0 : i32, i32
  }
  func.func @transform_5(%arg0: i32) -> (i32, i32, i32, i32) {
    %c0_i32 = arith.constant 0 : i32
    %c0_i32_0 = arith.constant 0 : i32
    %c0_i32_1 = arith.constant 0 : i32
    %c0_i32_2 = arith.constant 0 : i32
    return %arg0, %c0_i32, %c0_i32_0, %c0_i32_1 : i32, i32, i32, i32
  }
}

</mosaic_0001>

<llo_original>
// kernel: lightconv_forward.1
$region0: #{lightconv_forward.1}
  #allocation0 [shape = 'u32[]', space=smem, size = 0x4, offset = 0x4, fixed_abs, tag = 'smem constant byte address 0x4 - core index']
  #allocation1 [shape = 'u32[72,128]{1,0:T(1,128)}', space=vmem, size = 0x9000, scoped, tag = 'internal scratch']
  #allocation2 [shape = 'f32[1,18,18,128]{3,2,1,0:T(8,128)}', space=vmem, size = 0x36000, scoped, tag = 'scratch operand']
  %s0 = inlined_call_operand.hbm [shape: f32[2,16,16,64], index: 0, kind: input, shape index: {}]
  %s1 = inlined_call_operand.hbm [shape: f32[64,128], index: 1, kind: input, shape index: {}]
  %s2 = inlined_call_operand.hbm [shape: f32[1,128], index: 2, kind: input, shape index: {}]
  %s3 = inlined_call_operand.hbm [shape: f32[9,128], index: 3, kind: input, shape index: {}]
  %s4 = inlined_call_operand.vmem [shape: f32[1,128], index: 4, kind: input, shape index: {}]
  %s5 = inlined_call_operand.hbm [shape: f32[2,16,16,128], index: 5, kind: output, shape index: {}]
  %s6 = sld [smem:[#allocation0]]
  $region69: #{lightconv_forward.1} parent=0
    _
  %s8 = ssub.s32 1, %s6
  %s9 = scalar_select 0, %s8, %s6
  $region1: #{lightconv_forward.1} parent=0
    #allocation3 [shape = 'u8[262144]{0}', space=vmem, size = 0x40000, scoped, tag = 'input window, operand 0']
    #allocation4 [shape = 's32[2]{0}', space=sflag, size = 0x8, scoped, tag = 'scoped memory for lightconv_forward.1']
    #allocation5 [shape = 's32[2]{0}', space=sflag, size = 0x8, scoped, tag = 'scoped memory for lightconv_forward.1']
    #allocation6 [shape = 'u8[32768]{0}', space=vmem, size = 0x8000, scoped, tag = 'input window, operand 1, single buffered']
    #allocation7 [shape = 's32[1]{0}', space=sflag, size = 0x4, scoped, tag = 'scoped memory for lightconv_forward.1']
    #allocation8 [shape = 'u8[512]{0}', space=vmem, size = 0x400, scoped, tag = 'input window, operand 2, single buffered']
    #allocation9 [shape = 'u8[8192]{0}', space=vmem, size = 0x2000, scoped, tag = 'input window, operand 3, single buffered']
    #allocation10 [shape = 's32[1]{0}', space=sflag, size = 0x4, scoped, tag = 'scoped memory for lightconv_forward.1']
    #allocation11 [shape = 'u8[262144]{0}', space=vmem, size = 0x40000, scoped, tag = 'output window, operand 0']
    %10 = vsyncpa [#allocation4], 0
    %s11 = scalar_lea.sflag [#allocation4], 1
    %12 = vsyncpa %s11, 0
    %13 = vsyncpa [#allocation7], 0
    %14 = vsyncpa [#allocation10], 0
    %15 = vsyncpa [#allocation5], 0
    %s16 = scalar_lea.sflag [#allocation5], 1
    %17 = vsyncpa %s16, 0
    loop: start=0, step=1, limit=4
    $region2: #{lightconv_forward.1} parent=1 // loop_pre_header
      _
    $region3: #{lightconv_forward.1} parent=1 // loop_header
      %s19 = sphi 0, %s23
      %p20 = scmp.ge.s32.totalorder %s19, 4
      %s29 = sphi 0, %s31
      %s32 = sphi 0, %s29
      %s33 = sphi 0, %s32
      %s49 = sphi 0, %s33
      %s53 = sphi 0, %s53
      %s55 = sphi 0, %s53
      %s56 = sphi 0, %s55
      %s70 = sphi 0, %s56
      %s74 = sphi 0, %s74
      %s76 = sphi 0, %s74
      %s77 = sphi 0, %s76
      %s91 = sphi 0, %s77
      %s95 = sphi 0, %s95
      %s97 = sphi 0, %s95
      %s98 = sphi 0, %s97
      %s112 = sphi 0, %s98
      %s116 = sphi 0, %s116
      %s118 = sphi 0, %s116
      %s119 = sphi 0, %s118
      %s133 = sphi 0, %s119
      %s139 = sphi 0, %s141
      %s142 = sphi 0, %s139
      %s143 = sphi 0, %s142
      %s159 = sphi 0, %s143
    $region4: #{lightconv_forward.1} parent=1 // loop_header_branch
      %22 = sbr.rel (%p20) target = $region8
    $region5: #{lightconv_forward.1} parent=1 // loop_body
      %s24 = ssub.s32 %s19, 1
      %s25 = ssub.s32 %s19, 2
      %s26 = sadd.s32 %s19, 1
      %s27 = ssub.s32 %s19, %s26
      %p28 = scmp.eq.s32.totalorder %s27, 0
      %s30 = sadd.s32 %s29, 1
      %s31 = scalar_select %p28, %s29, %s30
      %p34 = pneg %p28
      %p35 = scmp.eq.s32.totalorder %s19, 1
      %p36 = por %p34, %p35
      %p37 = scmp.ne.s32.totalorder %s29, %s32
      %p38 = scmp.eq.s32.totalorder %s19, 0
      %p39 = por %p37, %p38
      %p40 = scmp.ne.s32.totalorder %s29, %s32
      %p41 = scmp.eq.s32.totalorder %s24, 1
      %p42 = por %p40, %p41
      %p43 = scmp.ne.s32.totalorder %s32, %s33
      %p44 = scmp.eq.s32.totalorder %s24, 0
      %p45 = por %p43, %p44
      %p46 = scmp.ne.s32.totalorder %s32, %s33
      %p47 = scmp.eq.s32.totalorder %s25, 1
      %p48 = por %p46, %p47
      %p50 = scmp.ne.s32.totalorder %s33, %s49
      %p51 = scmp.eq.s32.totalorder %s25, 0
      %p52 = por %p50, %p51
      %s54 = sadd.s32 %s53, 1
      %p57 = scmp.eq.s32.totalorder %s19, 1
      %p58 = scmp.ne.s32.totalorder %s53, %s55
      %p59 = scmp.eq.s32.totalorder %s19, 0
      %p60 = por %p58, %p59
      %p61 = scmp.ne.s32.totalorder %s53, %s55
      %p62 = scmp.eq.s32.totalorder %s24, 1
      %p63 = por %p61, %p62
      %p64 = scmp.ne.s32.totalorder %s55, %s56
      %p65 = scmp.eq.s32.totalorder %s24, 0
      %p66 = por %p64, %p65
      %p67 = scmp.ne.s32.totalorder %s55, %s56
      %p68 = scmp.eq.s32.totalorder %s25, 1
      %p69 = por %p67, %p68
      %p71 = scmp.ne.s32.totalorder %s56, %s70
      %p72 = scmp.eq.s32.totalorder %s25, 0
      %p73 = por %p71, %p72
      %s75 = sadd.s32 %s74, 1
      %p78 = scmp.eq.s32.totalorder %s19, 1
      %p79 = scmp.ne.s32.totalorder %s74, %s76
      %p80 = scmp.eq.s32.totalorder %s19, 0
      %p81 = por %p79, %p80
      %p82 = scmp.ne.s32.totalorder %s74, %s76
      %p83 = scmp.eq.s32.totalorder %s24, 1
      %p84 = por %p82, %p83
      %p85 = scmp.ne.s32.totalorder %s76, %s77
      %p86 = scmp.eq.s32.totalorder %s24, 0
      %p87 = por %p85, %p86
      %p88 = scmp.ne.s32.totalorder %s76, %s77
      %p89 = scmp.eq.s32.totalorder %s25, 1
      %p90 = por %p88, %p89
      %p92 = scmp.ne.s32.totalorder %s77, %s91
      %p93 = scmp.eq.s32.totalorder %s25, 0
      %p94 = por %p92, %p93
      %s96 = sadd.s32 %s95, 1
      %p99 = scmp.eq.s32.totalorder %s19, 1
      %p100 = scmp.ne.s32.totalorder %s95, %s97
      %p101 = scmp.eq.s32.totalorder %s19, 0
      %p102 = por %p100, %p101
      %p103 = scmp.ne.s32.totalorder %s95, %s97
      %p104 = scmp.eq.s32.totalorder %s24, 1
      %p105 = por %p103, %p104
      %p106 = scmp.ne.s32.totalorder %s97, %s98
      %p107 = scmp.eq.s32.totalorder %s24, 0
      %p108 = por %p106, %p107
      %p109 = scmp.ne.s32.totalorder %s97, %s98
      %p110 = scmp.eq.s32.totalorder %s25, 1
      %p111 = por %p109, %p110
      %p113 = scmp.ne.s32.totalorder %s98, %s112
      %p114 = scmp.eq.s32.totalorder %s25, 0
      %p115 = por %p113, %p114
      %s117 = sadd.s32 %s116, 1
      %p120 = scmp.eq.s32.totalorder %s19, 1
      %p121 = scmp.ne.s32.totalorder %s116, %s118
      %p122 = scmp.eq.s32.totalorder %s19, 0
      %p123 = por %p121, %p122
      %p124 = scmp.ne.s32.totalorder %s116, %s118
      %p125 = scmp.eq.s32.totalorder %s24, 1
      %p126 = por %p124, %p125
      %p127 = scmp.ne.s32.totalorder %s118, %s119
      %p128 = scmp.eq.s32.totalorder %s24, 0
      %p129 = por %p127, %p128
      %p130 = scmp.ne.s32.totalorder %s118, %s119
      %p131 = scmp.eq.s32.totalorder %s25, 1
      %p132 = por %p130, %p131
      %p134 = scmp.ne.s32.totalorder %s119, %s133
      %p135 = scmp.eq.s32.totalorder %s25, 0
      %p136 = por %p134, %p135
      %s137 = ssub.s32 %s19, %s26
      %p138 = scmp.eq.s32.totalorder %s137, 0
      %s140 = sadd.s32 %s139, 1
      %s141 = scalar_select %p138, %s139, %s140
      %p144 = pneg %p138
      %p145 = scmp.eq.s32.totalorder %s19, 1
      %p146 = por %p144, %p145
      %p147 = scmp.ne.s32.totalorder %s139, %s142
      %p148 = scmp.eq.s32.totalorder %s19, 0
      %p149 = por %p147, %p148
      %p150 = scmp.ne.s32.totalorder %s139, %s142
      %p151 = scmp.eq.s32.totalorder %s24, 1
      %p152 = por %p150, %p151
      %p153 = scmp.ne.s32.totalorder %s142, %s143
      %p154 = scmp.eq.s32.totalorder %s24, 0
      %p155 = por %p153, %p154
      %p156 = scmp.ne.s32.totalorder %s142, %s143
      %p157 = scmp.eq.s32.totalorder %s25, 1
      %p158 = por %p156, %p157
      %p160 = scmp.ne.s32.totalorder %s143, %s159
      %p161 = scmp.eq.s32.totalorder %s25, 0
      %p162 = por %p160, %p161
      %p163 = scmp.le.s32.totalorder 1, %s19
      %p164 = scmp.lt.s32.totalorder %s19, 3
      %p165 = pnand %p163, %p164
      %p166 = pneg %p165
      // Predicated region
      $region9: #{lightconv_forward.1} parent=5 // pred_check
        _
      $region10: #{lightconv_forward.1} parent=5 // pred_check_branch
        %168 = sbr.rel (%p165) target = $region12
      $region11: #{lightconv_forward.1} parent=5 // pred_region
        %s169 = ssub.s32 %s19, 1
        // Predicated region
        $region13: #{lightconv_forward.1} parent=11 // pred_check
          %p170 = pneg %p66
        $region14: #{lightconv_forward.1} parent=11 // pred_check_branch
          %172 = sbr.rel (%p170) target = $region16
        $region15: #{lightconv_forward.1} parent=11 // pred_region
          %174 = vsyncadd [#allocation7], 0
          %s175 = sshll.u32 %s1, 4
          %s176 = int_to_ptr.hbm [resolvable:$true] %s175
          %s177 = sshll.u32 [#allocation6], 4
          %s178 = int_to_ptr.vmem [resolvable:$true] %s177
          %183 = dma.hbm_to_vmem [thread:$0]  %s176, 1024, %s178, [#allocation7], 128, 128, 8
        $region16: #{lightconv_forward.1} parent=11 // pred_fallthru
          _
        // Predicated region
        $region17: #{lightconv_forward.1} parent=11 // pred_check
          %p184 = pneg %p87
        $region18: #{lightconv_forward.1} parent=11 // pred_check_branch
          %186 = sbr.rel (%p184) target = $region20
        $region19: #{lightconv_forward.1} parent=11 // pred_region
          %188 = vsyncadd [#allocation7], 0
          %s190 = sshll.u32 %s2, 4
          %s191 = int_to_ptr.hbm [resolvable:$true] %s190
          %s192 = sshll.u32 [#allocation8], 4
          %s193 = int_to_ptr.vmem [resolvable:$true] %s192
          %195 = dma.hbm_to_vmem [thread:$0]  %s191, 16, %s193, [#allocation7]
        $region20: #{lightconv_forward.1} parent=11 // pred_fallthru
          _
        // Predicated region
        $region21: #{lightconv_forward.1} parent=11 // pred_check
          %p196 = pneg %p108
        $region22: #{lightconv_forward.1} parent=11 // pred_check_branch
          %198 = sbr.rel (%p196) target = $region24
        $region23: #{lightconv_forward.1} parent=11 // pred_region
          %200 = vsyncadd [#allocation10], 0
          %s201 = sshll.u32 %s3, 4
          %s202 = int_to_ptr.hbm [resolvable:$true] %s201
          %s203 = sshll.u32 [#allocation9], 4
          %s204 = int_to_ptr.vmem [resolvable:$true] %s203
          %209 = dma.hbm_to_vmem [thread:$0]  %s202, 256, %s204, [#allocation10], 128, 128, 8
        $region24: #{lightconv_forward.1} parent=11 // pred_fallthru
          _
        // Predicated region
        $region25: #{lightconv_forward.1} parent=11 // pred_check
          %p210 = pneg %p129
        $region26: #{lightconv_forward.1} parent=11 // pred_check_branch
          %212 = sbr.rel (%p210) target = $region28
        $region27: #{lightconv_forward.1} parent=11 // pred_region
          _
        $region28: #{lightconv_forward.1} parent=11 // pred_fallthru
          _
      $region12: #{lightconv_forward.1} parent=5 // pred_fallthru
        _
      %p213 = scmp.lt.s32.totalorder %s19, 2
      // Predicated region
      $region29: #{lightconv_forward.1} parent=5 // pred_check
        %p214 = pneg %p213
      $region30: #{lightconv_forward.1} parent=5 // pred_check_branch
        %216 = sbr.rel (%p214) target = $region32
      $region31: #{lightconv_forward.1} parent=5 // pred_region
        // Predicated region
        $region33: #{lightconv_forward.1} parent=31 // pred_check
          %p217 = pneg %p39
        $region34: #{lightconv_forward.1} parent=31 // pred_check_branch
          %219 = sbr.rel (%p217) target = $region36
        $region35: #{lightconv_forward.1} parent=31 // pred_region
          %s220 = sand.u32 %s29, 1
          %s221 = scalar_lea.sflag [#allocation4], %s220
          %s222 = sand.u32 %s29, 1
          %s223 = smul.addr %s222, 256
          %s224 = scalar_lea.vmem [#allocation3], %s223
          %226 = vsyncadd %s221, 0
          %s227 = smul.addr %s19, 32
          %s228 = smul.addr %s227, 8
          %s229 = scalar_lea.hbm %s0, %s228
          %s230 = sshll.u32 %s229, 4
          %s231 = int_to_ptr.hbm [resolvable:$true] %s230
          %s232 = sshll.u32 %s224, 4
          %s233 = int_to_ptr.vmem [resolvable:$true] %s232
          %238 = dma.hbm_to_vmem [thread:$0]  %s231, 4096, %s233, %s221, 128, 128, 8
        $region36: #{lightconv_forward.1} parent=31 // pred_fallthru
          _
      $region32: #{lightconv_forward.1} parent=5 // pred_fallthru
        _
      %p239 = scmp.le.s32.totalorder 1, %s19
      %p240 = scmp.lt.s32.totalorder %s19, 3
      %p241 = pnand %p239, %p240
      %p242 = pneg %p241
      // Predicated region
      $region37: #{lightconv_forward.1} parent=5 // pred_check
        _
      $region38: #{lightconv_forward.1} parent=5 // pred_check_branch
        %244 = sbr.rel (%p241) target = $region40
      $region39: #{lightconv_forward.1} parent=5 // pred_region
        %s245 = ssub.s32 %s19, 1
        %s246 = sand.u32 %s32, 1
        %s247 = scalar_lea.sflag [#allocation4], %s246
        %s248 = sand.u32 %s32, 1
        %s249 = smul.addr %s248, 256
        %s250 = scalar_lea.vmem [#allocation3], %s249
        // Predicated region
        $region41: #{lightconv_forward.1} parent=39 // pred_check
          %p251 = pneg %p45
        $region42: #{lightconv_forward.1} parent=39 // pred_check_branch
          %253 = sbr.rel (%p251) target = $region44
        $region43: #{lightconv_forward.1} parent=39 // pred_region
          %255 = dma.done %s247, 4096
        $region44: #{lightconv_forward.1} parent=39 // pred_fallthru
          _
        // Predicated region
        $region45: #{lightconv_forward.1} parent=39 // pred_check
          %p256 = pneg %p66
        $region46: #{lightconv_forward.1} parent=39 // pred_check_branch
          %258 = sbr.rel (%p256) target = $region48
        $region47: #{lightconv_forward.1} parent=39 // pred_region
          %260 = dma.done [#allocation7], 1024
        $region48: #{lightconv_forward.1} parent=39 // pred_fallthru
          _
        // Predicated region
        $region49: #{lightconv_forward.1} parent=39 // pred_check
          %p261 = pneg %p87
        $region50: #{lightconv_forward.1} parent=39 // pred_check_branch
          %263 = sbr.rel (%p261) target = $region52
        $region51: #{lightconv_forward.1} parent=39 // pred_region
          %265 = dma.done [#allocation7], 16
        $region52: #{lightconv_forward.1} parent=39 // pred_fallthru
          _
        // Predicated region
        $region53: #{lightconv_forward.1} parent=39 // pred_check
          %p266 = pneg %p108
        $region54: #{lightconv_forward.1} parent=39 // pred_check_branch
          %268 = sbr.rel (%p266) target = $region56
        $region55: #{lightconv_forward.1} parent=39 // pred_region
          %270 = dma.done [#allocation10], 256
        $region56: #{lightconv_forward.1} parent=39 // pred_fallthru
          _
        %s271 = sand.u32 %s32, 1
        %s272 = scalar_lea.sflag [#allocation4], %s271
        %s273 = sand.u32 %s32, 1
        %s274 = smul.addr %s273, 256
        %s275 = scalar_lea.vmem [#allocation3], %s274
        %p276 = pneg %p45
        %p277 = pneg %p42
        %p278 = pneg %p66
        %p279 = pneg %p63
        %p280 = pneg %p87
        %p281 = pneg %p84
        %p282 = pneg %p108
        %p283 = pneg %p105
        %p284 = pneg %p129
        %p285 = pneg %p126
        %p286 = pneg %p155
        %p287 = pneg %p152
        %s288 = sand.u32 %s142, 1
        %s289 = scalar_lea.sflag [#allocation5], %s288
        %s290 = sand.u32 %s142, 1
        %s291 = smul.addr %s290, 256
        %s292 = scalar_lea.vmem [#allocation11], %s291
        %v293 = vld [vmem:[%s250] sm:$0xff]
        %v294 = vld [vmem:[%s250 + $0x8] sm:$0xff]
        %v295 = vld [vmem:[%s250 + $0x10] sm:$0xff]
        %v296 = vld [vmem:[%s250 + $0x18] sm:$0xff]
        %v297 = vld [vmem:[%s250 + $0x20] sm:$0xff]
        %v298 = vld [vmem:[%s250 + $0x28] sm:$0xff]
        %v299 = vld [vmem:[%s250 + $0x30] sm:$0xff]
        %v300 = vld [vmem:[%s250 + $0x38] sm:$0xff]
        %v301 = vld [vmem:[%s250 + $0x40] sm:$0xff]
        %v302 = vld [vmem:[%s250 + $0x48] sm:$0xff]
        %v303 = vld [vmem:[%s250 + $0x50] sm:$0xff]
        %v304 = vld [vmem:[%s250 + $0x58] sm:$0xff]
        %v305 = vld [vmem:[%s250 + $0x60] sm:$0xff]
        %v306 = vld [vmem:[%s250 + $0x68] sm:$0xff]
        %v307 = vld [vmem:[%s250 + $0x70] sm:$0xff]
        %v308 = vld [vmem:[%s250 + $0x78] sm:$0xff]
        %v309 = vld [vmem:[%s250 + $0x80] sm:$0xff]
        %v310 = vld [vmem:[%s250 + $0x88] sm:$0xff]
        %v311 = vld [vmem:[%s250 + $0x90] sm:$0xff]
        %v312 = vld [vmem:[%s250 + $0x98] sm:$0xff]
        %v313 = vld [vmem:[%s250 + $0xa0] sm:$0xff]
        %v314 = vld [vmem:[%s250 + $0xa8] sm:$0xff]
        %v315 = vld [vmem:[%s250 + $0xb0] sm:$0xff]
        %v316 = vld [vmem:[%s250 + $0xb8] sm:$0xff]
        %v317 = vld [vmem:[%s250 + $0xc0] sm:$0xff]
        %v318 = vld [vmem:[%s250 + $0xc8] sm:$0xff]
        %v319 = vld [vmem:[%s250 + $0xd0] sm:$0xff]
        %v320 = vld [vmem:[%s250 + $0xd8] sm:$0xff]
        %v321 = vld [vmem:[%s250 + $0xe0] sm:$0xff]
        %v322 = vld [vmem:[%s250 + $0xe8] sm:$0xff]
        %v323 = vld [vmem:[%s250 + $0xf0] sm:$0xff]
        %v324 = vld [vmem:[%s250 + $0xf8] sm:$0xff]
        %v325 = vld [vmem:[#allocation6] sm:$0xff]
        %v326 = vld [vmem:[#allocation6 + $0x8] sm:$0xff]
        %v327 = vld [vmem:[#allocation6 + $0x10] sm:$0xff]
        %v328 = vld [vmem:[#allocation6 + $0x18] sm:$0xff]
        %v329 = vld [vmem:[#allocation6 + $0x20] sm:$0xff]
        %v330 = vld [vmem:[#allocation6 + $0x28] sm:$0xff]
        %v331 = vld [vmem:[#allocation6 + $0x30] sm:$0xff]
        %v332 = vld [vmem:[#allocation6 + $0x38] sm:$0xff]
        %v333 = vld [vmem:[#allocation8] sm:$0x1]
        %v335 = vperm.slane %v333, 0
        %vm337 = vcmask 523264
        %v339 = vsel %vm337, %v293, 0
        %v342 = vsel %vm337, %v294, 0
        %v345 = vsel %vm337, %v295, 0
        %v348 = vsel %vm337, %v296, 0
        %v351 = vsel %vm337, %v297, 0
        %v354 = vsel %vm337, %v298, 0
        %v357 = vsel %vm337, %v299, 0
        %v360 = vsel %vm337, %v300, 0
        %v363 = vsel %vm337, %v301, 0
        %v366 = vsel %vm337, %v302, 0
        %v369 = vsel %vm337, %v303, 0
        %v372 = vsel %vm337, %v304, 0
        %v375 = vsel %vm337, %v305, 0
        %v378 = vsel %vm337, %v306, 0
        %v381 = vsel %vm337, %v307, 0
        %v384 = vsel %vm337, %v308, 0
        %v387 = vsel %vm337, %v309, 0
        %v390 = vsel %vm337, %v310, 0
        %v393 = vsel %vm337, %v311, 0
        %v396 = vsel %vm337, %v312, 0
        %v399 = vsel %vm337, %v313, 0
        %v402 = vsel %vm337, %v314, 0
        %v405 = vsel %vm337, %v315, 0
        %v408 = vsel %vm337, %v316, 0
        %v411 = vsel %vm337, %v317, 0
        %v414 = vsel %vm337, %v318, 0
        %v417 = vsel %vm337, %v319, 0
        %v420 = vsel %vm337, %v320, 0
        %v423 = vsel %vm337, %v321, 0
        %v426 = vsel %vm337, %v322, 0
        %v429 = vsel %vm337, %v323, 0
        %v432 = vsel %vm337, %v324, 0
        %434 = vmatpush.msra.mxu0 0.0
        %435 = vmatpush.msra.mxu0 0.0
        %436 = vmatpush.msra.mxu0 0.0
        %437 = vmatpush.msra.mxu0 0.0
        %438 = vmatpush.msra.mxu0 0.0
        %439 = vmatpush.msra.mxu0 0.0
        %440 = vmatpush.msra.mxu0 0.0
        %441 = vmatpush.msra.mxu0 0.0
        %442 = vmatpush.msra.mxu0 %v332
        %443 = vmatpush.msra.mxu0 %v331
        %444 = vmatpush.msra.mxu0 %v330
        %445 = vmatpush.msra.mxu0 %v329
        %446 = vmatpush.msra.mxu0 %v328
        %447 = vmatpush.msra.mxu0 %v327
        %448 = vmatpush.msra.mxu0 %v326
        %449 = vmatpush.msra.mxu0 %v325
        %450 = vmatmul.f32.gmra.mxu0 %v339
        %v451 = vpop.f32.mrf.mxu0
        %v452 = vadd.f32 %v335, %v451
        %453 = vmatmul.f32.gmra.mxu0 %v342
        %v454 = vpop.f32.mrf.mxu0
        %v455 = vadd.f32 %v335, %v454
        %456 = vmatmul.f32.gmra.mxu0 %v345
        %v457 = vpop.f32.mrf.mxu0
        %v458 = vadd.f32 %v335, %v457
        %459 = vmatmul.f32.gmra.mxu0 %v348
        %v460 = vpop.f32.mrf.mxu0
        %v461 = vadd.f32 %v335, %v460
        %462 = vmatmul.f32.gmra.mxu0 %v351
        %v463 = vpop.f32.mrf.mxu0
        %v464 = vadd.f32 %v335, %v463
        %465 = vmatmul.f32.gmra.mxu0 %v354
        %v466 = vpop.f32.mrf.mxu0
        %v467 = vadd.f32 %v335, %v466
        %468 = vmatmul.f32.gmra.mxu0 %v357
        %v469 = vpop.f32.mrf.mxu0
        %v470 = vadd.f32 %v335, %v469
        %471 = vmatmul.f32.gmra.mxu0 %v360
        %v472 = vpop.f32.mrf.mxu0
        %v473 = vadd.f32 %v335, %v472
        %474 = vmatmul.f32.gmra.mxu0 %v363
        %v475 = vpop.f32.mrf.mxu0
        %v476 = vadd.f32 %v335, %v475
        %477 = vmatmul.f32.gmra.mxu0 %v366
        %v478 = vpop.f32.mrf.mxu0
        %v479 = vadd.f32 %v335, %v478
        %480 = vmatmul.f32.gmra.mxu0 %v369
        %v481 = vpop.f32.mrf.mxu0
        %v482 = vadd.f32 %v335, %v481
        %483 = vmatmul.f32.gmra.mxu0 %v372
        %v484 = vpop.f32.mrf.mxu0
        %v485 = vadd.f32 %v335, %v484
        %486 = vmatmul.f32.gmra.mxu0 %v375
        %v487 = vpop.f32.mrf.mxu0
        %v488 = vadd.f32 %v335, %v487
        %489 = vmatmul.f32.gmra.mxu0 %v378
        %v490 = vpop.f32.mrf.mxu0
        %v491 = vadd.f32 %v335, %v490
        %492 = vmatmul.f32.gmra.mxu0 %v381
        %v493 = vpop.f32.mrf.mxu0
        %v494 = vadd.f32 %v335, %v493
        %495 = vmatmul.f32.gmra.mxu0 %v384
        %v496 = vpop.f32.mrf.mxu0
        %v497 = vadd.f32 %v335, %v496
        %498 = vmatmul.f32.gmra.mxu0 %v387
        %v499 = vpop.f32.mrf.mxu0
        %v500 = vadd.f32 %v335, %v499
        %501 = vmatmul.f32.gmra.mxu0 %v390
        %v502 = vpop.f32.mrf.mxu0
        %v503 = vadd.f32 %v335, %v502
        %504 = vmatmul.f32.gmra.mxu0 %v393
        %v505 = vpop.f32.mrf.mxu0
        %v506 = vadd.f32 %v335, %v505
        %507 = vmatmul.f32.gmra.mxu0 %v396
        %v508 = vpop.f32.mrf.mxu0
        %v509 = vadd.f32 %v335, %v508
        %510 = vmatmul.f32.gmra.mxu0 %v399
        %v511 = vpop.f32.mrf.mxu0
        %v512 = vadd.f32 %v335, %v511
        %513 = vmatmul.f32.gmra.mxu0 %v402
        %v514 = vpop.f32.mrf.mxu0
        %v515 = vadd.f32 %v335, %v514
        %516 = vmatmul.f32.gmra.mxu0 %v405
        %v517 = vpop.f32.mrf.mxu0
        %v518 = vadd.f32 %v335, %v517
        %519 = vmatmul.f32.gmra.mxu0 %v408
        %v520 = vpop.f32.mrf.mxu0
        %v521 = vadd.f32 %v335, %v520
        %522 = vmatmul.f32.gmra.mxu0 %v411
        %v523 = vpop.f32.mrf.mxu0
        %v524 = vadd.f32 %v335, %v523
        %525 = vmatmul.f32.gmra.mxu0 %v414
        %v526 = vpop.f32.mrf.mxu0
        %v527 = vadd.f32 %v335, %v526
        %528 = vmatmul.f32.gmra.mxu0 %v417
        %v529 = vpop.f32.mrf.mxu0
        %v530 = vadd.f32 %v335, %v529
        %531 = vmatmul.f32.gmra.mxu0 %v420
        %v532 = vpop.f32.mrf.mxu0
        %v533 = vadd.f32 %v335, %v532
        %534 = vmatmul.f32.gmra.mxu0 %v423
        %v535 = vpop.f32.mrf.mxu0
        %v536 = vadd.f32 %v335, %v535
        %537 = vmatmul.f32.gmra.mxu0 %v426
        %v538 = vpop.f32.mrf.mxu0
        %v539 = vadd.f32 %v335, %v538
        %540 = vmatmul.f32.gmra.mxu0 %v429
        %v541 = vpop.f32.mrf.mxu0
        %v542 = vadd.f32 %v335, %v541
        %543 = vmatmul.f32.gmra.mxu0 %v432
        %v544 = vpop.f32.mrf.mxu0
        %v545 = vadd.f32 %v335, %v544
        %546 = vdwg.mxu0
        %547 = vst [vmem:[#allocation2] sm:$0xff] 0.0
        %548 = vst [vmem:[#allocation2 + $0x8] sm:$0xff] 0.0
        %549 = vst [vmem:[#allocation2 + $0x10] sm:$0x3] 0.0
        %s550 = scalar_lea.vmem [#allocation2], 408
        %551 = vst [vmem:[%s550] sm:$0xff] 0.0
        %552 = vst [vmem:[%s550 + $0x8] sm:$0xff] 0.0
        %553 = vst [vmem:[%s550 + $0x10] sm:$0x3] 0.0
        %vm586 = vcmask 1040384
        %v587 = vrot.slane %v452, 7
        %v588 = vrot.slane %v455, 7
        %v589 = vsel %vm586, %v587, %v588
        %v590 = vrot.slane %v458, 7
        %v591 = vrot.slane %v461, 7
        %v592 = vsel %vm586, %v590, %v591
        %v593 = vrot.slane %v464, 7
        %v594 = vrot.slane %v467, 7
        %v595 = vsel %vm586, %v593, %v594
        %v596 = vrot.slane %v470, 7
        %v597 = vrot.slane %v473, 7
        %v598 = vsel %vm586, %v596, %v597
        %v599 = vrot.slane %v476, 7
        %v600 = vrot.slane %v479, 7
        %v601 = vsel %vm586, %v599, %v600
        %v602 = vrot.slane %v482, 7
        %v603 = vrot.slane %v485, 7
        %v604 = vsel %vm586, %v602, %v603
        %v605 = vrot.slane %v488, 7
        %v606 = vrot.slane %v491, 7
        %v607 = vsel %vm586, %v605, %v606
        %v608 = vrot.slane %v494, 7
        %v609 = vrot.slane %v497, 7
        %v610 = vsel %vm586, %v608, %v609
        %v611 = vrot.slane %v500, 7
        %v612 = vrot.slane %v503, 7
        %v613 = vsel %vm586, %v611, %v612
        %v614 = vrot.slane %v506, 7
        %v615 = vrot.slane %v509, 7
        %v616 = vsel %vm586, %v614, %v615
        %v617 = vrot.slane %v512, 7
        %v618 = vrot.slane %v515, 7
        %v619 = vsel %vm586, %v617, %v618
        %v620 = vrot.slane %v518, 7
        %v621 = vrot.slane %v521, 7
        %v622 = vsel %vm586, %v620, %v621
        %v623 = vrot.slane %v524, 7
        %v624 = vrot.slane %v527, 7
        %v625 = vsel %vm586, %v623, %v624
        %v626 = vrot.slane %v530, 7
        %v627 = vrot.slane %v533, 7
        %v628 = vsel %vm586, %v626, %v627
        %v629 = vrot.slane %v536, 7
        %v630 = vrot.slane %v539, 7
        %v631 = vsel %vm586, %v629, %v630
        %v632 = vrot.slane %v542, 7
        %v633 = vrot.slane %v545, 7
        %v634 = vsel %vm586, %v632, %v633
        %v683 = vsel %vm586, 0.0, %v587
        %v684 = vsel %vm586, 0.0, %v590
        %v685 = vsel %vm586, 0.0, %v593
        %v686 = vsel %vm586, 0.0, %v596
        %v687 = vsel %vm586, 0.0, %v599
        %v688 = vsel %vm586, 0.0, %v602
        %v689 = vsel %vm586, 0.0, %v605
        %v690 = vsel %vm586, 0.0, %v608
        %v691 = vsel %vm586, 0.0, %v611
        %v692 = vsel %vm586, 0.0, %v614
        %v693 = vsel %vm586, 0.0, %v617
        %v694 = vsel %vm586, 0.0, %v620
        %v695 = vsel %vm586, 0.0, %v623
        %v696 = vsel %vm586, 0.0, %v626
        %v697 = vsel %vm586, 0.0, %v629
        %v698 = vsel %vm586, 0.0, %v632
        %v699 = vsel %vm586, %v588, 0.0
        %v700 = vsel %vm586, %v591, 0.0
        %v701 = vsel %vm586, %v594, 0.0
        %v702 = vsel %vm586, %v597, 0.0
        %v703 = vsel %vm586, %v600, 0.0
        %v704 = vsel %vm586, %v603, 0.0
        %v705 = vsel %vm586, %v606, 0.0
        %v706 = vsel %vm586, %v609, 0.0
        %v707 = vsel %vm586, %v612, 0.0
        %v708 = vsel %vm586, %v615, 0.0
        %v709 = vsel %vm586, %v618, 0.0
        %v710 = vsel %vm586, %v621, 0.0
        %v711 = vsel %vm586, %v624, 0.0
        %v712 = vsel %vm586, %v627, 0.0
        %v713 = vsel %vm586, %v630, 0.0
        %v714 = vsel %vm586, %v633, 0.0
        %s715 = scalar_lea.vmem [#allocation2], 24
        %716 = vst [vmem:[%s715] sm:$0xff] %v683
        %717 = vst [vmem:[%s715 + $0x8] sm:$0xff] %v589
        %718 = vst [vmem:[%s715 + $0x10] sm:$0x3] %v699
        %719 = vst [vmem:[%s715 + $0x18] sm:$0xff] %v684
        %720 = vst [vmem:[%s715 + $0x20] sm:$0xff] %v592
        %721 = vst [vmem:[%s715 + $0x28] sm:$0x3] %v700
        %722 = vst [vmem:[%s715 + $0x30] sm:$0xff] %v685
        %723 = vst [vmem:[%s715 + $0x38] sm:$0xff] %v595
        %724 = vst [vmem:[%s715 + $0x40] sm:$0x3] %v701
        %725 = vst [vmem:[%s715 + $0x48] sm:$0xff] %v686
        %726 = vst [vmem:[%s715 + $0x50] sm:$0xff] %v598
        %727 = vst [vmem:[%s715 + $0x58] sm:$0x3] %v702
        %728 = vst [vmem:[%s715 + $0x60] sm:$0xff] %v687
        %729 = vst [vmem:[%s715 + $0x68] sm:$0xff] %v601
        %730 = vst [vmem:[%s715 + $0x70] sm:$0x3] %v703
        %731 = vst [vmem:[%s715 + $0x78] sm:$0xff] %v688
        %732 = vst [vmem:[%s715 + $0x80] sm:$0xff] %v604
        %733 = vst [vmem:[%s715 + $0x88] sm:$0x3] %v704
        %734 = vst [vmem:[%s715 + $0x90] sm:$0xff] %v689
        %735 = vst [vmem:[%s715 + $0x98] sm:$0xff] %v607
        %736 = vst [vmem:[%s715 + $0xa0] sm:$0x3] %v705
        %737 = vst [vmem:[%s715 + $0xa8] sm:$0xff] %v690
        %738 = vst [vmem:[%s715 + $0xb0] sm:$0xff] %v610
        %739 = vst [vmem:[%s715 + $0xb8] sm:$0x3] %v706
        %740 = vst [vmem:[%s715 + $0xc0] sm:$0xff] %v691
        %741 = vst [vmem:[%s715 + $0xc8] sm:$0xff] %v613
        %742 = vst [vmem:[%s715 + $0xd0] sm:$0x3] %v707
        %743 = vst [vmem:[%s715 + $0xd8] sm:$0xff] %v692
        %744 = vst [vmem:[%s715 + $0xe0] sm:$0xff] %v616
        %745 = vst [vmem:[%s715 + $0xe8] sm:$0x3] %v708
        %746 = vst [vmem:[%s715 + $0xf0] sm:$0xff] %v693
        %747 = vst [vmem:[%s715 + $0xf8] sm:$0xff] %v619
        %748 = vst [vmem:[%s715 + $0x100] sm:$0x3] %v709
        %749 = vst [vmem:[%s715 + $0x108] sm:$0xff] %v694
        %750 = vst [vmem:[%s715 + $0x110] sm:$0xff] %v622
        %751 = vst [vmem:[%s715 + $0x118] sm:$0x3] %v710
        %752 = vst [vmem:[%s715 + $0x120] sm:$0xff] %v695
        %753 = vst [vmem:[%s715 + $0x128] sm:$0xff] %v625
        %754 = vst [vmem:[%s715 + $0x130] sm:$0x3] %v711
        %755 = vst [vmem:[%s715 + $0x138] sm:$0xff] %v696
        %756 = vst [vmem:[%s715 + $0x140] sm:$0xff] %v628
        %757 = vst [vmem:[%s715 + $0x148] sm:$0x3] %v712
        %758 = vst [vmem:[%s715 + $0x150] sm:$0xff] %v697
        %759 = vst [vmem:[%s715 + $0x158] sm:$0xff] %v631
        %760 = vst [vmem:[%s715 + $0x160] sm:$0x3] %v713
        %761 = vst [vmem:[%s715 + $0x168] sm:$0xff] %v698
        %762 = vst [vmem:[%s715 + $0x170] sm:$0xff] %v634
        %763 = vst [vmem:[%s715 + $0x178] sm:$0x3] %v714
        %v764 = vld [vmem:[#allocation9] sm:$0xff]
        %v765 = vld [vmem:[#allocation9 + $0x8] sm:$0x1]
        %v766 = vld [vmem:[%s4] sm:$0x1]
        %v768 = vperm.slane %v766, 0
        %v770 = vld [vmem:[#allocation2] sm:$0xff]
        %v771 = vld [vmem:[#allocation2 + $0x8] sm:$0xff]
        %v772 = vld [vmem:[#allocation2 + $0x18] sm:$0xff]
        %v773 = vld [vmem:[#allocation2 + $0x20] sm:$0xff]
        %v774 = vld [vmem:[#allocation2 + $0x30] sm:$0xff]
        %v775 = vld [vmem:[#allocation2 + $0x38] sm:$0xff]
        %v776 = vld [vmem:[#allocation2 + $0x48] sm:$0xff]
        %v777 = vld [vmem:[#allocation2 + $0x50] sm:$0xff]
        %v778 = vld [vmem:[#allocation2 + $0x60] sm:$0xff]
        %v779 = vld [vmem:[#allocation2 + $0x68] sm:$0xff]
        %v780 = vld [vmem:[#allocation2 + $0x78] sm:$0xff]
        %v781 = vld [vmem:[#allocation2 + $0x80] sm:$0xff]
        %v782 = vld [vmem:[#allocation2 + $0x90] sm:$0xff]
        %v783 = vld [vmem:[#allocation2 + $0x98] sm:$0xff]
        %v784 = vld [vmem:[#allocation2 + $0xa8] sm:$0xff]
        %v785 = vld [vmem:[#allocation2 + $0xb0] sm:$0xff]
        %v786 = vperm.slane %v764, 0
        %v787 = vmul.f32 %v770, %v786
        %v788 = vmul.f32 %v771, %v786
        %v789 = vmul.f32 %v772, %v786
        %v790 = vmul.f32 %v773, %v786
        %v791 = vmul.f32 %v774, %v786
        %v792 = vmul.f32 %v775, %v786
        %v793 = vmul.f32 %v776, %v786
        %v794 = vmul.f32 %v777, %v786
        %v795 = vmul.f32 %v778, %v786
        %v796 = vmul.f32 %v779, %v786
        %v797 = vmul.f32 %v780, %v786
        %v798 = vmul.f32 %v781, %v786
        %v799 = vmul.f32 %v782, %v786
        %v800 = vmul.f32 %v783, %v786
        %v801 = vmul.f32 %v784, %v786
        %v802 = vmul.f32 %v785, %v786
        %v803 = vadd.f32 %v768, %v787
        %v804 = vadd.f32 %v768, %v788
        %v805 = vadd.f32 %v768, %v789
        %v806 = vadd.f32 %v768, %v790
        %v807 = vadd.f32 %v768, %v791
        %v808 = vadd.f32 %v768, %v792
        %v809 = vadd.f32 %v768, %v793
        %v810 = vadd.f32 %v768, %v794
        %v811 = vadd.f32 %v768, %v795
        %v812 = vadd.f32 %v768, %v796
        %v813 = vadd.f32 %v768, %v797
        %v814 = vadd.f32 %v768, %v798
        %v815 = vadd.f32 %v768, %v799
        %v816 = vadd.f32 %v768, %v800
        %v817 = vadd.f32 %v768, %v801
        %v818 = vadd.f32 %v768, %v802
        %v819 = vld [vmem:[%s715] sm:$0xff]
        %v820 = vld [vmem:[%s715 + $0x8] sm:$0xff]
        %v821 = vld [vmem:[%s715 + $0x18] sm:$0xff]
        %v822 = vld [vmem:[%s715 + $0x20] sm:$0xff]
        %v823 = vld [vmem:[%s715 + $0x30] sm:$0xff]
        %v824 = vld [vmem:[%s715 + $0x38] sm:$0xff]
        %v825 = vld [vmem:[%s715 + $0x48] sm:$0xff]
        %v826 = vld [vmem:[%s715 + $0x50] sm:$0xff]
        %v827 = vld [vmem:[%s715 + $0x60] sm:$0xff]
        %v828 = vld [vmem:[%s715 + $0x68] sm:$0xff]
        %v829 = vld [vmem:[%s715 + $0x78] sm:$0xff]
        %v830 = vld [vmem:[%s715 + $0x80] sm:$0xff]
        %v831 = vld [vmem:[%s715 + $0x90] sm:$0xff]
        %v832 = vld [vmem:[%s715 + $0x98] sm:$0xff]
        %v833 = vld [vmem:[%s715 + $0xa8] sm:$0xff]
        %v834 = vld [vmem:[%s715 + $0xb0] sm:$0xff]
        %v835 = vperm.slane %v764, 3
        %v836 = vmul.f32 %v819, %v835
        %v837 = vmul.f32 %v820, %v835
        %v838 = vmul.f32 %v821, %v835
        %v839 = vmul.f32 %v822, %v835
        %v840 = vmul.f32 %v823, %v835
        %v841 = vmul.f32 %v824, %v835
        %v842 = vmul.f32 %v825, %v835
        %v843 = vmul.f32 %v826, %v835
        %v844 = vmul.f32 %v827, %v835
        %v845 = vmul.f32 %v828, %v835
        %v846 = vmul.f32 %v829, %v835
        %v847 = vmul.f32 %v830, %v835
        %v848 = vmul.f32 %v831, %v835
        %v849 = vmul.f32 %v832, %v835
        %v850 = vmul.f32 %v833, %v835
        %v851 = vmul.f32 %v834, %v835
        %v852 = vadd.f32 %v803, %v836
        %v853 = vadd.f32 %v804, %v837
        %v854 = vadd.f32 %v805, %v838
        %v855 = vadd.f32 %v806, %v839
        %v856 = vadd.f32 %v807, %v840
        %v857 = vadd.f32 %v808, %v841
        %v858 = vadd.f32 %v809, %v842
        %v859 = vadd.f32 %v810, %v843
        %v860 = vadd.f32 %v811, %v844
        %v861 = vadd.f32 %v812, %v845
        %v862 = vadd.f32 %v813, %v846
        %v863 = vadd.f32 %v814, %v847
        %v864 = vadd.f32 %v815, %v848
        %v865 = vadd.f32 %v816, %v849
        %v866 = vadd.f32 %v817, %v850
        %v867 = vadd.f32 %v818, %v851
        %s868 = scalar_lea.vmem [#allocation2], 48
        %v869 = vld [vmem:[%s868] sm:$0xff]
        %v870 = vld [vmem:[%s868 + $0x8] sm:$0xff]
        %v871 = vld [vmem:[%s868 + $0x18] sm:$0xff]
        %v872 = vld [vmem:[%s868 + $0x20] sm:$0xff]
        %v873 = vld [vmem:[%s868 + $0x30] sm:$0xff]
        %v874 = vld [vmem:[%s868 + $0x38] sm:$0xff]
        %v875 = vld [vmem:[%s868 + $0x48] sm:$0xff]
        %v876 = vld [vmem:[%s868 + $0x50] sm:$0xff]
        %v877 = vld [vmem:[%s868 + $0x60] sm:$0xff]
        %v878 = vld [vmem:[%s868 + $0x68] sm:$0xff]
        %v879 = vld [vmem:[%s868 + $0x78] sm:$0xff]
        %v880 = vld [vmem:[%s868 + $0x80] sm:$0xff]
        %v881 = vld [vmem:[%s868 + $0x90] sm:$0xff]
        %v882 = vld [vmem:[%s868 + $0x98] sm:$0xff]
        %v883 = vld [vmem:[%s868 + $0xa8] sm:$0xff]
        %v884 = vld [vmem:[%s868 + $0xb0] sm:$0xff]
        %v885 = vperm.slane %v764, 6
        %v886 = vmul.f32 %v869, %v885
        %v887 = vmul.f32 %v870, %v885
        %v888 = vmul.f32 %v871, %v885
        %v889 = vmul.f32 %v872, %v885
        %v890 = vmul.f32 %v873, %v885
        %v891 = vmul.f32 %v874, %v885
        %v892 = vmul.f32 %v875, %v885
        %v893 = vmul.f32 %v876, %v885
        %v894 = vmul.f32 %v877, %v885
        %v895 = vmul.f32 %v878, %v885
        %v896 = vmul.f32 %v879, %v885
        %v897 = vmul.f32 %v880, %v885
        %v898 = vmul.f32 %v881, %v885
        %v899 = vmul.f32 %v882, %v885
        %v900 = vmul.f32 %v883, %v885
        %v901 = vmul.f32 %v884, %v885
        %v902 = vadd.f32 %v852, %v886
        %v903 = vadd.f32 %v853, %v887
        %v904 = vadd.f32 %v854, %v888
        %v905 = vadd.f32 %v855, %v889
        %v906 = vadd.f32 %v856, %v890
        %v907 = vadd.f32 %v857, %v891
        %v908 = vadd.f32 %v858, %v892
        %v909 = vadd.f32 %v859, %v893
        %v910 = vadd.f32 %v860, %v894
        %v911 = vadd.f32 %v861, %v895
        %v912 = vadd.f32 %v862, %v896
        %v913 = vadd.f32 %v863, %v897
        %v914 = vadd.f32 %v864, %v898
        %v915 = vadd.f32 %v865, %v899
        %v916 = vadd.f32 %v866, %v900
        %v917 = vadd.f32 %v867, %v901
        %v918 = vld [vmem:[#allocation2 + $0x1] sm:$0xff]
        %v919 = vld [vmem:[#allocation2 + $0x9] sm:$0xff]
        %v920 = vld [vmem:[#allocation2 + $0x19] sm:$0xff]
        %v921 = vld [vmem:[#allocation2 + $0x21] sm:$0xff]
        %v922 = vld [vmem:[#allocation2 + $0x31] sm:$0xff]
        %v923 = vld [vmem:[#allocation2 + $0x39] sm:$0xff]
        %v924 = vld [vmem:[#allocation2 + $0x49] sm:$0xff]
        %v925 = vld [vmem:[#allocation2 + $0x51] sm:$0xff]
        %v926 = vld [vmem:[#allocation2 + $0x61] sm:$0xff]
        %v927 = vld [vmem:[#allocation2 + $0x69] sm:$0xff]
        %v928 = vld [vmem:[#allocation2 + $0x79] sm:$0xff]
        %v929 = vld [vmem:[#allocation2 + $0x81] sm:$0xff]
        %v930 = vld [vmem:[#allocation2 + $0x91] sm:$0xff]
        %v931 = vld [vmem:[#allocation2 + $0x99] sm:$0xff]
        %v932 = vld [vmem:[#allocation2 + $0xa9] sm:$0xff]
        %v933 = vld [vmem:[#allocation2 + $0xb1] sm:$0xff]
        %v934 = vperm.slane %v764, 1
        %v935 = vmul.f32 %v918, %v934
        %v936 = vmul.f32 %v919, %v934
        %v937 = vmul.f32 %v920, %v934
        %v938 = vmul.f32 %v921, %v934
        %v939 = vmul.f32 %v922, %v934
        %v940 = vmul.f32 %v923, %v934
        %v941 = vmul.f32 %v924, %v934
        %v942 = vmul.f32 %v925, %v934
        %v943 = vmul.f32 %v926, %v934
        %v944 = vmul.f32 %v927, %v934
        %v945 = vmul.f32 %v928, %v934
        %v946 = vmul.f32 %v929, %v934
        %v947 = vmul.f32 %v930, %v934
        %v948 = vmul.f32 %v931, %v934
        %v949 = vmul.f32 %v932, %v934
        %v950 = vmul.f32 %v933, %v934
        %v951 = vadd.f32 %v902, %v935
        %v952 = vadd.f32 %v903, %v936
        %v953 = vadd.f32 %v904, %v937
        %v954 = vadd.f32 %v905, %v938
        %v955 = vadd.f32 %v906, %v939
        %v956 = vadd.f32 %v907, %v940
        %v957 = vadd.f32 %v908, %v941
        %v958 = vadd.f32 %v909, %v942
        %v959 = vadd.f32 %v910, %v943
        %v960 = vadd.f32 %v911, %v944
        %v961 = vadd.f32 %v912, %v945
        %v962 = vadd.f32 %v913, %v946
        %v963 = vadd.f32 %v914, %v947
        %v964 = vadd.f32 %v915, %v948
        %v965 = vadd.f32 %v916, %v949
        %v966 = vadd.f32 %v917, %v950
        %v967 = vld [vmem:[%s715 + $0x1] sm:$0xff]
        %v968 = vld [vmem:[%s715 + $0x9] sm:$0xff]
        %v969 = vld [vmem:[%s715 + $0x19] sm:$0xff]
        %v970 = vld [vmem:[%s715 + $0x21] sm:$0xff]
        %v971 = vld [vmem:[%s715 + $0x31] sm:$0xff]
        %v972 = vld [vmem:[%s715 + $0x39] sm:$0xff]
        %v973 = vld [vmem:[%s715 + $0x49] sm:$0xff]
        %v974 = vld [vmem:[%s715 + $0x51] sm:$0xff]
        %v975 = vld [vmem:[%s715 + $0x61] sm:$0xff]
        %v976 = vld [vmem:[%s715 + $0x69] sm:$0xff]
        %v977 = vld [vmem:[%s715 + $0x79] sm:$0xff]
        %v978 = vld [vmem:[%s715 + $0x81] sm:$0xff]
        %v979 = vld [vmem:[%s715 + $0x91] sm:$0xff]
        %v980 = vld [vmem:[%s715 + $0x99] sm:$0xff]
        %v981 = vld [vmem:[%s715 + $0xa9] sm:$0xff]
        %v982 = vld [vmem:[%s715 + $0xb1] sm:$0xff]
        %v983 = vperm.slane %v764, 4
        %v984 = vmul.f32 %v967, %v983
        %v985 = vmul.f32 %v968, %v983
        %v986 = vmul.f32 %v969, %v983
        %v987 = vmul.f32 %v970, %v983
        %v988 = vmul.f32 %v971, %v983
        %v989 = vmul.f32 %v972, %v983
        %v990 = vmul.f32 %v973, %v983
        %v991 = vmul.f32 %v974, %v983
        %v992 = vmul.f32 %v975, %v983
        %v993 = vmul.f32 %v976, %v983
        %v994 = vmul.f32 %v977, %v983
        %v995 = vmul.f32 %v978, %v983
        %v996 = vmul.f32 %v979, %v983
        %v997 = vmul.f32 %v980, %v983
        %v998 = vmul.f32 %v981, %v983
        %v999 = vmul.f32 %v982, %v983
        %v1000 = vadd.f32 %v951, %v984
        %v1001 = vadd.f32 %v952, %v985
        %v1002 = vadd.f32 %v953, %v986
        %v1003 = vadd.f32 %v954, %v987
        %v1004 = vadd.f32 %v955, %v988
        %v1005 = vadd.f32 %v956, %v989
        %v1006 = vadd.f32 %v957, %v990
        %v1007 = vadd.f32 %v958, %v991
        %v1008 = vadd.f32 %v959, %v992
        %v1009 = vadd.f32 %v960, %v993
        %v1010 = vadd.f32 %v961, %v994
        %v1011 = vadd.f32 %v962, %v995
        %v1012 = vadd.f32 %v963, %v996
        %v1013 = vadd.f32 %v964, %v997
        %v1014 = vadd.f32 %v965, %v998
        %v1015 = vadd.f32 %v966, %v999
        %v1016 = vld [vmem:[%s868 + $0x1] sm:$0xff]
        %v1017 = vld [vmem:[%s868 + $0x9] sm:$0xff]
        %v1018 = vld [vmem:[%s868 + $0x19] sm:$0xff]
        %v1019 = vld [vmem:[%s868 + $0x21] sm:$0xff]
        %v1020 = vld [vmem:[%s868 + $0x31] sm:$0xff]
        %v1021 = vld [vmem:[%s868 + $0x39] sm:$0xff]
        %v1022 = vld [vmem:[%s868 + $0x49] sm:$0xff]
        %v1023 = vld [vmem:[%s868 + $0x51] sm:$0xff]
        %v1024 = vld [vmem:[%s868 + $0x61] sm:$0xff]
        %v1025 = vld [vmem:[%s868 + $0x69] sm:$0xff]
        %v1026 = vld [vmem:[%s868 + $0x79] sm:$0xff]
        %v1027 = vld [vmem:[%s868 + $0x81] sm:$0xff]
        %v1028 = vld [vmem:[%s868 + $0x91] sm:$0xff]
        %v1029 = vld [vmem:[%s868 + $0x99] sm:$0xff]
        %v1030 = vld [vmem:[%s868 + $0xa9] sm:$0xff]
        %v1031 = vld [vmem:[%s868 + $0xb1] sm:$0xff]
        %v1032 = vperm.slane %v764, 7
        %v1033 = vmul.f32 %v1016, %v1032
        %v1034 = vmul.f32 %v1017, %v1032
        %v1035 = vmul.f32 %v1018, %v1032
        %v1036 = vmul.f32 %v1019, %v1032
        %v1037 = vmul.f32 %v1020, %v1032
        %v1038 = vmul.f32 %v1021, %v1032
        %v1039 = vmul.f32 %v1022, %v1032
        %v1040 = vmul.f32 %v1023, %v1032
        %v1041 = vmul.f32 %v1024, %v1032
        %v1042 = vmul.f32 %v1025, %v1032
        %v1043 = vmul.f32 %v1026, %v1032
        %v1044 = vmul.f32 %v1027, %v1032
        %v1045 = vmul.f32 %v1028, %v1032
        %v1046 = vmul.f32 %v1029, %v1032
        %v1047 = vmul.f32 %v1030, %v1032
        %v1048 = vmul.f32 %v1031, %v1032
        %v1049 = vadd.f32 %v1000, %v1033
        %v1050 = vadd.f32 %v1001, %v1034
        %v1051 = vadd.f32 %v1002, %v1035
        %v1052 = vadd.f32 %v1003, %v1036
        %v1053 = vadd.f32 %v1004, %v1037
        %v1054 = vadd.f32 %v1005, %v1038
        %v1055 = vadd.f32 %v1006, %v1039
        %v1056 = vadd.f32 %v1007, %v1040
        %v1057 = vadd.f32 %v1008, %v1041
        %v1058 = vadd.f32 %v1009, %v1042
        %v1059 = vadd.f32 %v1010, %v1043
        %v1060 = vadd.f32 %v1011, %v1044
        %v1061 = vadd.f32 %v1012, %v1045
        %v1062 = vadd.f32 %v1013, %v1046
        %v1063 = vadd.f32 %v1014, %v1047
        %v1064 = vadd.f32 %v1015, %v1048
        %v1065 = vld [vmem:[#allocation2 + $0x2] sm:$0xff]
        %v1066 = vld [vmem:[#allocation2 + $0xa] sm:$0xff]
        %v1067 = vld [vmem:[#allocation2 + $0x1a] sm:$0xff]
        %v1068 = vld [vmem:[#allocation2 + $0x22] sm:$0xff]
        %v1069 = vld [vmem:[#allocation2 + $0x32] sm:$0xff]
        %v1070 = vld [vmem:[#allocation2 + $0x3a] sm:$0xff]
        %v1071 = vld [vmem:[#allocation2 + $0x4a] sm:$0xff]
        %v1072 = vld [vmem:[#allocation2 + $0x52] sm:$0xff]
        %v1073 = vld [vmem:[#allocation2 + $0x62] sm:$0xff]
        %v1074 = vld [vmem:[#allocation2 + $0x6a] sm:$0xff]
        %v1075 = vld [vmem:[#allocation2 + $0x7a] sm:$0xff]
        %v1076 = vld [vmem:[#allocation2 + $0x82] sm:$0xff]
        %v1077 = vld [vmem:[#allocation2 + $0x92] sm:$0xff]
        %v1078 = vld [vmem:[#allocation2 + $0x9a] sm:$0xff]
        %v1079 = vld [vmem:[#allocation2 + $0xaa] sm:$0xff]
        %v1080 = vld [vmem:[#allocation2 + $0xb2] sm:$0xff]
        %v1081 = vperm.slane %v764, 2
        %v1082 = vmul.f32 %v1065, %v1081
        %v1083 = vmul.f32 %v1066, %v1081
        %v1084 = vmul.f32 %v1067, %v1081
        %v1085 = vmul.f32 %v1068, %v1081
        %v1086 = vmul.f32 %v1069, %v1081
        %v1087 = vmul.f32 %v1070, %v1081
        %v1088 = vmul.f32 %v1071, %v1081
        %v1089 = vmul.f32 %v1072, %v1081
        %v1090 = vmul.f32 %v1073, %v1081
        %v1091 = vmul.f32 %v1074, %v1081
        %v1092 = vmul.f32 %v1075, %v1081
        %v1093 = vmul.f32 %v1076, %v1081
        %v1094 = vmul.f32 %v1077, %v1081
        %v1095 = vmul.f32 %v1078, %v1081
        %v1096 = vmul.f32 %v1079, %v1081
        %v1097 = vmul.f32 %v1080, %v1081
        %v1098 = vadd.f32 %v1049, %v1082
        %v1099 = vadd.f32 %v1050, %v1083
        %v1100 = vadd.f32 %v1051, %v1084
        %v1101 = vadd.f32 %v1052, %v1085
        %v1102 = vadd.f32 %v1053, %v1086
        %v1103 = vadd.f32 %v1054, %v1087
        %v1104 = vadd.f32 %v1055, %v1088
        %v1105 = vadd.f32 %v1056, %v1089
        %v1106 = vadd.f32 %v1057, %v1090
        %v1107 = vadd.f32 %v1058, %v1091
        %v1108 = vadd.f32 %v1059, %v1092
        %v1109 = vadd.f32 %v1060, %v1093
        %v1110 = vadd.f32 %v1061, %v1094
        %v1111 = vadd.f32 %v1062, %v1095
        %v1112 = vadd.f32 %v1063, %v1096
        %v1113 = vadd.f32 %v1064, %v1097
        %v1114 = vld [vmem:[%s715 + $0x2] sm:$0xff]
        %v1115 = vld [vmem:[%s715 + $0xa] sm:$0xff]
        %v1116 = vld [vmem:[%s715 + $0x1a] sm:$0xff]
        %v1117 = vld [vmem:[%s715 + $0x22] sm:$0xff]
        %v1118 = vld [vmem:[%s715 + $0x32] sm:$0xff]
        %v1119 = vld [vmem:[%s715 + $0x3a] sm:$0xff]
        %v1120 = vld [vmem:[%s715 + $0x4a] sm:$0xff]
        %v1121 = vld [vmem:[%s715 + $0x52] sm:$0xff]
        %v1122 = vld [vmem:[%s715 + $0x62] sm:$0xff]
        %v1123 = vld [vmem:[%s715 + $0x6a] sm:$0xff]
        %v1124 = vld [vmem:[%s715 + $0x7a] sm:$0xff]
        %v1125 = vld [vmem:[%s715 + $0x82] sm:$0xff]
        %v1126 = vld [vmem:[%s715 + $0x92] sm:$0xff]
        %v1127 = vld [vmem:[%s715 + $0x9a] sm:$0xff]
        %v1128 = vld [vmem:[%s715 + $0xaa] sm:$0xff]
        %v1129 = vld [vmem:[%s715 + $0xb2] sm:$0xff]
        %v1130 = vperm.slane %v764, 5
        %v1131 = vmul.f32 %v1114, %v1130
        %v1132 = vmul.f32 %v1115, %v1130
        %v1133 = vmul.f32 %v1116, %v1130
        %v1134 = vmul.f32 %v1117, %v1130
        %v1135 = vmul.f32 %v1118, %v1130
        %v1136 = vmul.f32 %v1119, %v1130
        %v1137 = vmul.f32 %v1120, %v1130
        %v1138 = vmul.f32 %v1121, %v1130
        %v1139 = vmul.f32 %v1122, %v1130
        %v1140 = vmul.f32 %v1123, %v1130
        %v1141 = vmul.f32 %v1124, %v1130
        %v1142 = vmul.f32 %v1125, %v1130
        %v1143 = vmul.f32 %v1126, %v1130
        %v1144 = vmul.f32 %v1127, %v1130
        %v1145 = vmul.f32 %v1128, %v1130
        %v1146 = vmul.f32 %v1129, %v1130
        %v1147 = vadd.f32 %v1098, %v1131
        %v1148 = vadd.f32 %v1099, %v1132
        %v1149 = vadd.f32 %v1100, %v1133
        %v1150 = vadd.f32 %v1101, %v1134
        %v1151 = vadd.f32 %v1102, %v1135
        %v1152 = vadd.f32 %v1103, %v1136
        %v1153 = vadd.f32 %v1104, %v1137
        %v1154 = vadd.f32 %v1105, %v1138
        %v1155 = vadd.f32 %v1106, %v1139
        %v1156 = vadd.f32 %v1107, %v1140
        %v1157 = vadd.f32 %v1108, %v1141
        %v1158 = vadd.f32 %v1109, %v1142
        %v1159 = vadd.f32 %v1110, %v1143
        %v1160 = vadd.f32 %v1111, %v1144
        %v1161 = vadd.f32 %v1112, %v1145
        %v1162 = vadd.f32 %v1113, %v1146
        %v1163 = vld [vmem:[%s868 + $0x2] sm:$0xff]
        %v1164 = vld [vmem:[%s868 + $0xa] sm:$0xff]
        %v1165 = vld [vmem:[%s868 + $0x1a] sm:$0xff]
        %v1166 = vld [vmem:[%s868 + $0x22] sm:$0xff]
        %v1167 = vld [vmem:[%s868 + $0x32] sm:$0xff]
        %v1168 = vld [vmem:[%s868 + $0x3a] sm:$0xff]
        %v1169 = vld [vmem:[%s868 + $0x4a] sm:$0xff]
        %v1170 = vld [vmem:[%s868 + $0x52] sm:$0xff]
        %v1171 = vld [vmem:[%s868 + $0x62] sm:$0xff]
        %v1172 = vld [vmem:[%s868 + $0x6a] sm:$0xff]
        %v1173 = vld [vmem:[%s868 + $0x7a] sm:$0xff]
        %v1174 = vld [vmem:[%s868 + $0x82] sm:$0xff]
        %v1175 = vld [vmem:[%s868 + $0x92] sm:$0xff]
        %v1176 = vld [vmem:[%s868 + $0x9a] sm:$0xff]
        %v1177 = vld [vmem:[%s868 + $0xaa] sm:$0xff]
        %v1178 = vld [vmem:[%s868 + $0xb2] sm:$0xff]
        %v1179 = vperm.slane %v765, 0
        %v1180 = vmul.f32 %v1163, %v1179
        %v1181 = vmul.f32 %v1164, %v1179
        %v1182 = vmul.f32 %v1165, %v1179
        %v1183 = vmul.f32 %v1166, %v1179
        %v1184 = vmul.f32 %v1167, %v1179
        %v1185 = vmul.f32 %v1168, %v1179
        %v1186 = vmul.f32 %v1169, %v1179
        %v1187 = vmul.f32 %v1170, %v1179
        %v1188 = vmul.f32 %v1171, %v1179
        %v1189 = vmul.f32 %v1172, %v1179
        %v1190 = vmul.f32 %v1173, %v1179
        %v1191 = vmul.f32 %v1174, %v1179
        %v1192 = vmul.f32 %v1175, %v1179
        %v1193 = vmul.f32 %v1176, %v1179
        %v1194 = vmul.f32 %v1177, %v1179
        %v1195 = vmul.f32 %v1178, %v1179
        %v1196 = vadd.f32 %v1147, %v1180
        %v1197 = vadd.f32 %v1148, %v1181
        %v1198 = vadd.f32 %v1149, %v1182
        %v1199 = vadd.f32 %v1150, %v1183
        %v1200 = vadd.f32 %v1151, %v1184
        %v1201 = vadd.f32 %v1152, %v1185
        %v1202 = vadd.f32 %v1153, %v1186
        %v1203 = vadd.f32 %v1154, %v1187
        %v1204 = vadd.f32 %v1155, %v1188
        %v1205 = vadd.f32 %v1156, %v1189
        %v1206 = vadd.f32 %v1157, %v1190
        %v1207 = vadd.f32 %v1158, %v1191
        %v1208 = vadd.f32 %v1159, %v1192
        %v1209 = vadd.f32 %v1160, %v1193
        %v1210 = vadd.f32 %v1161, %v1194
        %v1211 = vadd.f32 %v1162, %v1195
        %v1212 = vmax.f32 %v1196, 0.0
        %v1213 = vmax.f32 %v1197, 0.0
        %v1214 = vmax.f32 %v1198, 0.0
        %v1215 = vmax.f32 %v1199, 0.0
        %v1216 = vmax.f32 %v1200, 0.0
        %v1217 = vmax.f32 %v1201, 0.0
        %v1218 = vmax.f32 %v1202, 0.0
        %v1219 = vmax.f32 %v1203, 0.0
        %v1220 = vmax.f32 %v1204, 0.0
        %v1221 = vmax.f32 %v1205, 0.0
        %v1222 = vmax.f32 %v1206, 0.0
        %v1223 = vmax.f32 %v1207, 0.0
        %v1224 = vmax.f32 %v1208, 0.0
        %v1225 = vmax.f32 %v1209, 0.0
        %v1226 = vmax.f32 %v1210, 0.0
        %v1227 = vmax.f32 %v1211, 0.0
        %1228 = vst [vmem:[%s292] sm:$0xff] %v1212
        %1229 = vst [vmem:[%s292 + $0x8] sm:$0xff] %v1213
        %1230 = vst [vmem:[%s292 + $0x10] sm:$0xff] %v1214
        %1231 = vst [vmem:[%s292 + $0x18] sm:$0xff] %v1215
        %1232 = vst [vmem:[%s292 + $0x20] sm:$0xff] %v1216
        %1233 = vst [vmem:[%s292 + $0x28] sm:$0xff] %v1217
        %1234 = vst [vmem:[%s292 + $0x30] sm:$0xff] %v1218
        %1235 = vst [vmem:[%s292 + $0x38] sm:$0xff] %v1219
        %1236 = vst [vmem:[%s292 + $0x40] sm:$0xff] %v1220
        %1237 = vst [vmem:[%s292 + $0x48] sm:$0xff] %v1221
        %1238 = vst [vmem:[%s292 + $0x50] sm:$0xff] %v1222
        %1239 = vst [vmem:[%s292 + $0x58] sm:$0xff] %v1223
        %1240 = vst [vmem:[%s292 + $0x60] sm:$0xff] %v1224
        %1241 = vst [vmem:[%s292 + $0x68] sm:$0xff] %v1225
        %1242 = vst [vmem:[%s292 + $0x70] sm:$0xff] %v1226
        %1243 = vst [vmem:[%s292 + $0x78] sm:$0xff] %v1227
        %s1244 = scalar_lea.vmem [#allocation2], 192
        %v1245 = vld [vmem:[%s1244] sm:$0xff]
        %v1246 = vld [vmem:[%s1244 + $0x8] sm:$0xff]
        %v1247 = vld [vmem:[%s1244 + $0x18] sm:$0xff]
        %v1248 = vld [vmem:[%s1244 + $0x20] sm:$0xff]
        %v1249 = vld [vmem:[%s1244 + $0x30] sm:$0xff]
        %v1250 = vld [vmem:[%s1244 + $0x38] sm:$0xff]
        %v1251 = vld [vmem:[%s1244 + $0x48] sm:$0xff]
        %v1252 = vld [vmem:[%s1244 + $0x50] sm:$0xff]
        %v1253 = vld [vmem:[%s1244 + $0x60] sm:$0xff]
        %v1254 = vld [vmem:[%s1244 + $0x68] sm:$0xff]
        %v1255 = vld [vmem:[%s1244 + $0x78] sm:$0xff]
        %v1256 = vld [vmem:[%s1244 + $0x80] sm:$0xff]
        %v1257 = vld [vmem:[%s1244 + $0x90] sm:$0xff]
        %v1258 = vld [vmem:[%s1244 + $0x98] sm:$0xff]
        %v1259 = vld [vmem:[%s1244 + $0xa8] sm:$0xff]
        %v1260 = vld [vmem:[%s1244 + $0xb0] sm:$0xff]
        %v1261 = vmul.f32 %v1245, %v786
        %v1262 = vmul.f32 %v1246, %v786
        %v1263 = vmul.f32 %v1247, %v786
        %v1264 = vmul.f32 %v1248, %v786
        %v1265 = vmul.f32 %v1249, %v786
        %v1266 = vmul.f32 %v1250, %v786
        %v1267 = vmul.f32 %v1251, %v786
        %v1268 = vmul.f32 %v1252, %v786
        %v1269 = vmul.f32 %v1253, %v786
        %v1270 = vmul.f32 %v1254, %v786
        %v1271 = vmul.f32 %v1255, %v786
        %v1272 = vmul.f32 %v1256, %v786
        %v1273 = vmul.f32 %v1257, %v786
        %v1274 = vmul.f32 %v1258, %v786
        %v1275 = vmul.f32 %v1259, %v786
        %v1276 = vmul.f32 %v1260, %v786
        %v1277 = vadd.f32 %v768, %v1261
        %v1278 = vadd.f32 %v768, %v1262
        %v1279 = vadd.f32 %v768, %v1263
        %v1280 = vadd.f32 %v768, %v1264
        %v1281 = vadd.f32 %v768, %v1265
        %v1282 = vadd.f32 %v768, %v1266
        %v1283 = vadd.f32 %v768, %v1267
        %v1284 = vadd.f32 %v768, %v1268
        %v1285 = vadd.f32 %v768, %v1269
        %v1286 = vadd.f32 %v768, %v1270
        %v1287 = vadd.f32 %v768, %v1271
        %v1288 = vadd.f32 %v768, %v1272
        %v1289 = vadd.f32 %v768, %v1273
        %v1290 = vadd.f32 %v768, %v1274
        %v1291 = vadd.f32 %v768, %v1275
        %v1292 = vadd.f32 %v768, %v1276
        %s1293 = scalar_lea.vmem [#allocation2], 216
        %v1294 = vld [vmem:[%s1293] sm:$0xff]
        %v1295 = vld [vmem:[%s1293 + $0x8] sm:$0xff]
        %v1296 = vld [vmem:[%s1293 + $0x18] sm:$0xff]
        %v1297 = vld [vmem:[%s1293 + $0x20] sm:$0xff]
        %v1298 = vld [vmem:[%s1293 + $0x30] sm:$0xff]
        %v1299 = vld [vmem:[%s1293 + $0x38] sm:$0xff]
        %v1300 = vld [vmem:[%s1293 + $0x48] sm:$0xff]
        %v1301 = vld [vmem:[%s1293 + $0x50] sm:$0xff]
        %v1302 = vld [vmem:[%s1293 + $0x60] sm:$0xff]
        %v1303 = vld [vmem:[%s1293 + $0x68] sm:$0xff]
        %v1304 = vld [vmem:[%s1293 + $0x78] sm:$0xff]
        %v1305 = vld [vmem:[%s1293 + $0x80] sm:$0xff]
        %v1306 = vld [vmem:[%s1293 + $0x90] sm:$0xff]
        %v1307 = vld [vmem:[%s1293 + $0x98] sm:$0xff]
        %v1308 = vld [vmem:[%s1293 + $0xa8] sm:$0xff]
        %v1309 = vld [vmem:[%s1293 + $0xb0] sm:$0xff]
        %v1310 = vmul.f32 %v1294, %v835
        %v1311 = vmul.f32 %v1295, %v835
        %v1312 = vmul.f32 %v1296, %v835
        %v1313 = vmul.f32 %v1297, %v835
        %v1314 = vmul.f32 %v1298, %v835
        %v1315 = vmul.f32 %v1299, %v835
        %v1316 = vmul.f32 %v1300, %v835
        %v1317 = vmul.f32 %v1301, %v835
        %v1318 = vmul.f32 %v1302, %v835
        %v1319 = vmul.f32 %v1303, %v835
        %v1320 = vmul.f32 %v1304, %v835
        %v1321 = vmul.f32 %v1305, %v835
        %v1322 = vmul.f32 %v1306, %v835
        %v1323 = vmul.f32 %v1307, %v835
        %v1324 = vmul.f32 %v1308, %v835
        %v1325 = vmul.f32 %v1309, %v835
        %v1326 = vadd.f32 %v1277, %v1310
        %v1327 = vadd.f32 %v1278, %v1311
        %v1328 = vadd.f32 %v1279, %v1312
        %v1329 = vadd.f32 %v1280, %v1313
        %v1330 = vadd.f32 %v1281, %v1314
        %v1331 = vadd.f32 %v1282, %v1315
        %v1332 = vadd.f32 %v1283, %v1316
        %v1333 = vadd.f32 %v1284, %v1317
        %v1334 = vadd.f32 %v1285, %v1318
        %v1335 = vadd.f32 %v1286, %v1319
        %v1336 = vadd.f32 %v1287, %v1320
        %v1337 = vadd.f32 %v1288, %v1321
        %v1338 = vadd.f32 %v1289, %v1322
        %v1339 = vadd.f32 %v1290, %v1323
        %v1340 = vadd.f32 %v1291, %v1324
        %v1341 = vadd.f32 %v1292, %v1325
        %s1342 = scalar_lea.vmem [#allocation2], 240
        %v1343 = vld [vmem:[%s1342] sm:$0xff]
        %v1344 = vld [vmem:[%s1342 + $0x8] sm:$0xff]
        %v1345 = vld [vmem:[%s1342 + $0x18] sm:$0xff]
        %v1346 = vld [vmem:[%s1342 + $0x20] sm:$0xff]
        %v1347 = vld [vmem:[%s1342 + $0x30] sm:$0xff]
        %v1348 = vld [vmem:[%s1342 + $0x38] sm:$0xff]
        %v1349 = vld [vmem:[%s1342 + $0x48] sm:$0xff]
        %v1350 = vld [vmem:[%s1342 + $0x50] sm:$0xff]
        %v1351 = vld [vmem:[%s1342 + $0x60] sm:$0xff]
        %v1352 = vld [vmem:[%s1342 + $0x68] sm:$0xff]
        %v1353 = vld [vmem:[%s1342 + $0x78] sm:$0xff]
        %v1354 = vld [vmem:[%s1342 + $0x80] sm:$0xff]
        %v1355 = vld [vmem:[%s1342 + $0x90] sm:$0xff]
        %v1356 = vld [vmem:[%s1342 + $0x98] sm:$0xff]
        %v1357 = vld [vmem:[%s1342 + $0xa8] sm:$0xff]
        %v1358 = vld [vmem:[%s1342 + $0xb0] sm:$0xff]
        %v1359 = vmul.f32 %v1343, %v885
        %v1360 = vmul.f32 %v1344, %v885
        %v1361 = vmul.f32 %v1345, %v885
        %v1362 = vmul.f32 %v1346, %v885
        %v1363 = vmul.f32 %v1347, %v885
        %v1364 = vmul.f32 %v1348, %v885
        %v1365 = vmul.f32 %v1349, %v885
        %v1366 = vmul.f32 %v1350, %v885
        %v1367 = vmul.f32 %v1351, %v885
        %v1368 = vmul.f32 %v1352, %v885
        %v1369 = vmul.f32 %v1353, %v885
        %v1370 = vmul.f32 %v1354, %v885
        %v1371 = vmul.f32 %v1355, %v885
        %v1372 = vmul.f32 %v1356, %v885
        %v1373 = vmul.f32 %v1357, %v885
        %v1374 = vmul.f32 %v1358, %v885
        %v1375 = vadd.f32 %v1326, %v1359
        %v1376 = vadd.f32 %v1327, %v1360
        %v1377 = vadd.f32 %v1328, %v1361
        %v1378 = vadd.f32 %v1329, %v1362
        %v1379 = vadd.f32 %v1330, %v1363
        %v1380 = vadd.f32 %v1331, %v1364
        %v1381 = vadd.f32 %v1332, %v1365
        %v1382 = vadd.f32 %v1333, %v1366
        %v1383 = vadd.f32 %v1334, %v1367
        %v1384 = vadd.f32 %v1335, %v1368
        %v1385 = vadd.f32 %v1336, %v1369
        %v1386 = vadd.f32 %v1337, %v1370
        %v1387 = vadd.f32 %v1338, %v1371
        %v1388 = vadd.f32 %v1339, %v1372
        %v1389 = vadd.f32 %v1340, %v1373
        %v1390 = vadd.f32 %v1341, %v1374
        %v1391 = vld [vmem:[%s1244 + $0x1] sm:$0xff]
        %v1392 = vld [vmem:[%s1244 + $0x9] sm:$0xff]
        %v1393 = vld [vmem:[%s1244 + $0x19] sm:$0xff]
        %v1394 = vld [vmem:[%s1244 + $0x21] sm:$0xff]
        %v1395 = vld [vmem:[%s1244 + $0x31] sm:$0xff]
        %v1396 = vld [vmem:[%s1244 + $0x39] sm:$0xff]
        %v1397 = vld [vmem:[%s1244 + $0x49] sm:$0xff]
        %v1398 = vld [vmem:[%s1244 + $0x51] sm:$0xff]
        %v1399 = vld [vmem:[%s1244 + $0x61] sm:$0xff]
        %v1400 = vld [vmem:[%s1244 + $0x69] sm:$0xff]
        %v1401 = vld [vmem:[%s1244 + $0x79] sm:$0xff]
        %v1402 = vld [vmem:[%s1244 + $0x81] sm:$0xff]
        %v1403 = vld [vmem:[%s1244 + $0x91] sm:$0xff]
        %v1404 = vld [vmem:[%s1244 + $0x99] sm:$0xff]
        %v1405 = vld [vmem:[%s1244 + $0xa9] sm:$0xff]
        %v1406 = vld [vmem:[%s1244 + $0xb1] sm:$0xff]
        %v1407 = vmul.f32 %v1391, %v934
        %v1408 = vmul.f32 %v1392, %v934
        %v1409 = vmul.f32 %v1393, %v934
        %v1410 = vmul.f32 %v1394, %v934
        %v1411 = vmul.f32 %v1395, %v934
        %v1412 = vmul.f32 %v1396, %v934
        %v1413 = vmul.f32 %v1397, %v934
        %v1414 = vmul.f32 %v1398, %v934
        %v1415 = vmul.f32 %v1399, %v934
        %v1416 = vmul.f32 %v1400, %v934
        %v1417 = vmul.f32 %v1401, %v934
        %v1418 = vmul.f32 %v1402, %v934
        %v1419 = vmul.f32 %v1403, %v934
        %v1420 = vmul.f32 %v1404, %v934
        %v1421 = vmul.f32 %v1405, %v934
        %v1422 = vmul.f32 %v1406, %v934
        %v1423 = vadd.f32 %v1375, %v1407
        %v1424 = vadd.f32 %v1376, %v1408
        %v1425 = vadd.f32 %v1377, %v1409
        %v1426 = vadd.f32 %v1378, %v1410
        %v1427 = vadd.f32 %v1379, %v1411
        %v1428 = vadd.f32 %v1380, %v1412
        %v1429 = vadd.f32 %v1381, %v1413
        %v1430 = vadd.f32 %v1382, %v1414
        %v1431 = vadd.f32 %v1383, %v1415
        %v1432 = vadd.f32 %v1384, %v1416
        %v1433 = vadd.f32 %v1385, %v1417
        %v1434 = vadd.f32 %v1386, %v1418
        %v1435 = vadd.f32 %v1387, %v1419
        %v1436 = vadd.f32 %v1388, %v1420
        %v1437 = vadd.f32 %v1389, %v1421
        %v1438 = vadd.f32 %v1390, %v1422
        %v1439 = vld [vmem:[%s1293 + $0x1] sm:$0xff]
        %v1440 = vld [vmem:[%s1293 + $0x9] sm:$0xff]
        %v1441 = vld [vmem:[%s1293 + $0x19] sm:$0xff]
        %v1442 = vld [vmem:[%s1293 + $0x21] sm:$0xff]
        %v1443 = vld [vmem:[%s1293 + $0x31] sm:$0xff]
        %v1444 = vld [vmem:[%s1293 + $0x39] sm:$0xff]
        %v1445 = vld [vmem:[%s1293 + $0x49] sm:$0xff]
        %v1446 = vld [vmem:[%s1293 + $0x51] sm:$0xff]
        %v1447 = vld [vmem:[%s1293 + $0x61] sm:$0xff]
        %v1448 = vld [vmem:[%s1293 + $0x69] sm:$0xff]
        %v1449 = vld [vmem:[%s1293 + $0x79] sm:$0xff]
        %v1450 = vld [vmem:[%s1293 + $0x81] sm:$0xff]
        %v1451 = vld [vmem:[%s1293 + $0x91] sm:$0xff]
        %v1452 = vld [vmem:[%s1293 + $0x99] sm:$0xff]
        %v1453 = vld [vmem:[%s1293 + $0xa9] sm:$0xff]
        %v1454 = vld [vmem:[%s1293 + $0xb1] sm:$0xff]
        %v1455 = vmul.f32 %v1439, %v983
        %v1456 = vmul.f32 %v1440, %v983
        %v1457 = vmul.f32 %v1441, %v983
        %v1458 = vmul.f32 %v1442, %v983
        %v1459 = vmul.f32 %v1443, %v983
        %v1460 = vmul.f32 %v1444, %v983
        %v1461 = vmul.f32 %v1445, %v983
        %v1462 = vmul.f32 %v1446, %v983
        %v1463 = vmul.f32 %v1447, %v983
        %v1464 = vmul.f32 %v1448, %v983
        %v1465 = vmul.f32 %v1449, %v983
        %v1466 = vmul.f32 %v1450, %v983
        %v1467 = vmul.f32 %v1451, %v983
        %v1468 = vmul.f32 %v1452, %v983
        %v1469 = vmul.f32 %v1453, %v983
        %v1470 = vmul.f32 %v1454, %v983
        %v1471 = vadd.f32 %v1423, %v1455
        %v1472 = vadd.f32 %v1424, %v1456
        %v1473 = vadd.f32 %v1425, %v1457
        %v1474 = vadd.f32 %v1426, %v1458
        %v1475 = vadd.f32 %v1427, %v1459
        %v1476 = vadd.f32 %v1428, %v1460
        %v1477 = vadd.f32 %v1429, %v1461
        %v1478 = vadd.f32 %v1430, %v1462
        %v1479 = vadd.f32 %v1431, %v1463
        %v1480 = vadd.f32 %v1432, %v1464
        %v1481 = vadd.f32 %v1433, %v1465
        %v1482 = vadd.f32 %v1434, %v1466
        %v1483 = vadd.f32 %v1435, %v1467
        %v1484 = vadd.f32 %v1436, %v1468
        %v1485 = vadd.f32 %v1437, %v1469
        %v1486 = vadd.f32 %v1438, %v1470
        %v1487 = vld [vmem:[%s1342 + $0x1] sm:$0xff]
        %v1488 = vld [vmem:[%s1342 + $0x9] sm:$0xff]
        %v1489 = vld [vmem:[%s1342 + $0x19] sm:$0xff]
        %v1490 = vld [vmem:[%s1342 + $0x21] sm:$0xff]
        %v1491 = vld [vmem:[%s1342 + $0x31] sm:$0xff]
        %v1492 = vld [vmem:[%s1342 + $0x39] sm:$0xff]
        %v1493 = vld [vmem:[%s1342 + $0x49] sm:$0xff]
        %v1494 = vld [vmem:[%s1342 + $0x51] sm:$0xff]
        %v1495 = vld [vmem:[%s1342 + $0x61] sm:$0xff]
        %v1496 = vld [vmem:[%s1342 + $0x69] sm:$0xff]
        %v1497 = vld [vmem:[%s1342 + $0x79] sm:$0xff]
        %v1498 = vld [vmem:[%s1342 + $0x81] sm:$0xff]
        %v1499 = vld [vmem:[%s1342 + $0x91] sm:$0xff]
        %v1500 = vld [vmem:[%s1342 + $0x99] sm:$0xff]
        %v1501 = vld [vmem:[%s1342 + $0xa9] sm:$0xff]
        %v1502 = vld [vmem:[%s1342 + $0xb1] sm:$0xff]
        %v1503 = vmul.f32 %v1487, %v1032
        %v1504 = vmul.f32 %v1488, %v1032
        %v1505 = vmul.f32 %v1489, %v1032
        %v1506 = vmul.f32 %v1490, %v1032
        %v1507 = vmul.f32 %v1491, %v1032
        %v1508 = vmul.f32 %v1492, %v1032
        %v1509 = vmul.f32 %v1493, %v1032
        %v1510 = vmul.f32 %v1494, %v1032
        %v1511 = vmul.f32 %v1495, %v1032
        %v1512 = vmul.f32 %v1496, %v1032
        %v1513 = vmul.f32 %v1497, %v1032
        %v1514 = vmul.f32 %v1498, %v1032
        %v1515 = vmul.f32 %v1499, %v1032
        %v1516 = vmul.f32 %v1500, %v1032
        %v1517 = vmul.f32 %v1501, %v1032
        %v1518 = vmul.f32 %v1502, %v1032
        %v1519 = vadd.f32 %v1471, %v1503
        %v1520 = vadd.f32 %v1472, %v1504
        %v1521 = vadd.f32 %v1473, %v1505
        %v1522 = vadd.f32 %v1474, %v1506
        %v1523 = vadd.f32 %v1475, %v1507
        %v1524 = vadd.f32 %v1476, %v1508
        %v1525 = vadd.f32 %v1477, %v1509
        %v1526 = vadd.f32 %v1478, %v1510
        %v1527 = vadd.f32 %v1479, %v1511
        %v1528 = vadd.f32 %v1480, %v1512
        %v1529 = vadd.f32 %v1481, %v1513
        %v1530 = vadd.f32 %v1482, %v1514
        %v1531 = vadd.f32 %v1483, %v1515
        %v1532 = vadd.f32 %v1484, %v1516
        %v1533 = vadd.f32 %v1485, %v1517
        %v1534 = vadd.f32 %v1486, %v1518
        %v1535 = vld [vmem:[%s1244 + $0x2] sm:$0xff]
        %v1536 = vld [vmem:[%s1244 + $0xa] sm:$0xff]
        %v1537 = vld [vmem:[%s1244 + $0x1a] sm:$0xff]
        %v1538 = vld [vmem:[%s1244 + $0x22] sm:$0xff]
        %v1539 = vld [vmem:[%s1244 + $0x32] sm:$0xff]
        %v1540 = vld [vmem:[%s1244 + $0x3a] sm:$0xff]
        %v1541 = vld [vmem:[%s1244 + $0x4a] sm:$0xff]
        %v1542 = vld [vmem:[%s1244 + $0x52] sm:$0xff]
        %v1543 = vld [vmem:[%s1244 + $0x62] sm:$0xff]
        %v1544 = vld [vmem:[%s1244 + $0x6a] sm:$0xff]
        %v1545 = vld [vmem:[%s1244 + $0x7a] sm:$0xff]
        %v1546 = vld [vmem:[%s1244 + $0x82] sm:$0xff]
        %v1547 = vld [vmem:[%s1244 + $0x92] sm:$0xff]
        %v1548 = vld [vmem:[%s1244 + $0x9a] sm:$0xff]
        %v1549 = vld [vmem:[%s1244 + $0xaa] sm:$0xff]
        %v1550 = vld [vmem:[%s1244 + $0xb2] sm:$0xff]
        %v1551 = vmul.f32 %v1535, %v1081
        %v1552 = vmul.f32 %v1536, %v1081
        %v1553 = vmul.f32 %v1537, %v1081
        %v1554 = vmul.f32 %v1538, %v1081
        %v1555 = vmul.f32 %v1539, %v1081
        %v1556 = vmul.f32 %v1540, %v1081
        %v1557 = vmul.f32 %v1541, %v1081
        %v1558 = vmul.f32 %v1542, %v1081
        %v1559 = vmul.f32 %v1543, %v1081
        %v1560 = vmul.f32 %v1544, %v1081
        %v1561 = vmul.f32 %v1545, %v1081
        %v1562 = vmul.f32 %v1546, %v1081
        %v1563 = vmul.f32 %v1547, %v1081
        %v1564 = vmul.f32 %v1548, %v1081
        %v1565 = vmul.f32 %v1549, %v1081
        %v1566 = vmul.f32 %v1550, %v1081
        %v1567 = vadd.f32 %v1519, %v1551
        %v1568 = vadd.f32 %v1520, %v1552
        %v1569 = vadd.f32 %v1521, %v1553
        %v1570 = vadd.f32 %v1522, %v1554
        %v1571 = vadd.f32 %v1523, %v1555
        %v1572 = vadd.f32 %v1524, %v1556
        %v1573 = vadd.f32 %v1525, %v1557
        %v1574 = vadd.f32 %v1526, %v1558
        %v1575 = vadd.f32 %v1527, %v1559
        %v1576 = vadd.f32 %v1528, %v1560
        %v1577 = vadd.f32 %v1529, %v1561
        %v1578 = vadd.f32 %v1530, %v1562
        %v1579 = vadd.f32 %v1531, %v1563
        %v1580 = vadd.f32 %v1532, %v1564
        %v1581 = vadd.f32 %v1533, %v1565
        %v1582 = vadd.f32 %v1534, %v1566
        %v1583 = vld [vmem:[%s1293 + $0x2] sm:$0xff]
        %v1584 = vld [vmem:[%s1293 + $0xa] sm:$0xff]
        %v1585 = vld [vmem:[%s1293 + $0x1a] sm:$0xff]
        %v1586 = vld [vmem:[%s1293 + $0x22] sm:$0xff]
        %v1587 = vld [vmem:[%s1293 + $0x32] sm:$0xff]
        %v1588 = vld [vmem:[%s1293 + $0x3a] sm:$0xff]
        %v1589 = vld [vmem:[%s1293 + $0x4a] sm:$0xff]
        %v1590 = vld [vmem:[%s1293 + $0x52] sm:$0xff]
        %v1591 = vld [vmem:[%s1293 + $0x62] sm:$0xff]
        %v1592 = vld [vmem:[%s1293 + $0x6a] sm:$0xff]
        %v1593 = vld [vmem:[%s1293 + $0x7a] sm:$0xff]
        %v1594 = vld [vmem:[%s1293 + $0x82] sm:$0xff]
        %v1595 = vld [vmem:[%s1293 + $0x92] sm:$0xff]
        %v1596 = vld [vmem:[%s1293 + $0x9a] sm:$0xff]
        %v1597 = vld [vmem:[%s1293 + $0xaa] sm:$0xff]
        %v1598 = vld [vmem:[%s1293 + $0xb2] sm:$0xff]
        %v1599 = vmul.f32 %v1583, %v1130
        %v1600 = vmul.f32 %v1584, %v1130
        %v1601 = vmul.f32 %v1585, %v1130
        %v1602 = vmul.f32 %v1586, %v1130
        %v1603 = vmul.f32 %v1587, %v1130
        %v1604 = vmul.f32 %v1588, %v1130
        %v1605 = vmul.f32 %v1589, %v1130
        %v1606 = vmul.f32 %v1590, %v1130
        %v1607 = vmul.f32 %v1591, %v1130
        %v1608 = vmul.f32 %v1592, %v1130
        %v1609 = vmul.f32 %v1593, %v1130
        %v1610 = vmul.f32 %v1594, %v1130
        %v1611 = vmul.f32 %v1595, %v1130
        %v1612 = vmul.f32 %v1596, %v1130
        %v1613 = vmul.f32 %v1597, %v1130
        %v1614 = vmul.f32 %v1598, %v1130
        %v1615 = vadd.f32 %v1567, %v1599
        %v1616 = vadd.f32 %v1568, %v1600
        %v1617 = vadd.f32 %v1569, %v1601
        %v1618 = vadd.f32 %v1570, %v1602
        %v1619 = vadd.f32 %v1571, %v1603
        %v1620 = vadd.f32 %v1572, %v1604
        %v1621 = vadd.f32 %v1573, %v1605
        %v1622 = vadd.f32 %v1574, %v1606
        %v1623 = vadd.f32 %v1575, %v1607
        %v1624 = vadd.f32 %v1576, %v1608
        %v1625 = vadd.f32 %v1577, %v1609
        %v1626 = vadd.f32 %v1578, %v1610
        %v1627 = vadd.f32 %v1579, %v1611
        %v1628 = vadd.f32 %v1580, %v1612
        %v1629 = vadd.f32 %v1581, %v1613
        %v1630 = vadd.f32 %v1582, %v1614
        %v1631 = vld [vmem:[%s1342 + $0x2] sm:$0xff]
        %v1632 = vld [vmem:[%s1342 + $0xa] sm:$0xff]
        %v1633 = vld [vmem:[%s1342 + $0x1a] sm:$0xff]
        %v1634 = vld [vmem:[%s1342 + $0x22] sm:$0xff]
        %v1635 = vld [vmem:[%s1342 + $0x32] sm:$0xff]
        %v1636 = vld [vmem:[%s1342 + $0x3a] sm:$0xff]
        %v1637 = vld [vmem:[%s1342 + $0x4a] sm:$0xff]
        %v1638 = vld [vmem:[%s1342 + $0x52] sm:$0xff]
        %v1639 = vld [vmem:[%s1342 + $0x62] sm:$0xff]
        %v1640 = vld [vmem:[%s1342 + $0x6a] sm:$0xff]
        %v1641 = vld [vmem:[%s1342 + $0x7a] sm:$0xff]
        %v1642 = vld [vmem:[%s1342 + $0x82] sm:$0xff]
        %v1643 = vld [vmem:[%s1342 + $0x92] sm:$0xff]
        %v1644 = vld [vmem:[%s1342 + $0x9a] sm:$0xff]
        %v1645 = vld [vmem:[%s1342 + $0xaa] sm:$0xff]
        %v1646 = vld [vmem:[%s1342 + $0xb2] sm:$0xff]
        %v1647 = vmul.f32 %v1631, %v1179
        %v1648 = vmul.f32 %v1632, %v1179
        %v1649 = vmul.f32 %v1633, %v1179
        %v1650 = vmul.f32 %v1634, %v1179
        %v1651 = vmul.f32 %v1635, %v1179
        %v1652 = vmul.f32 %v1636, %v1179
        %v1653 = vmul.f32 %v1637, %v1179
        %v1654 = vmul.f32 %v1638, %v1179
        %v1655 = vmul.f32 %v1639, %v1179
        %v1656 = vmul.f32 %v1640, %v1179
        %v1657 = vmul.f32 %v1641, %v1179
        %v1658 = vmul.f32 %v1642, %v1179
        %v1659 = vmul.f32 %v1643, %v1179
        %v1660 = vmul.f32 %v1644, %v1179
        %v1661 = vmul.f32 %v1645, %v1179
        %v1662 = vmul.f32 %v1646, %v1179
        %v1663 = vadd.f32 %v1615, %v1647
        %v1664 = vadd.f32 %v1616, %v1648
        %v1665 = vadd.f32 %v1617, %v1649
        %v1666 = vadd.f32 %v1618, %v1650
        %v1667 = vadd.f32 %v1619, %v1651
        %v1668 = vadd.f32 %v1620, %v1652
        %v1669 = vadd.f32 %v1621, %v1653
        %v1670 = vadd.f32 %v1622, %v1654
        %v1671 = vadd.f32 %v1623, %v1655
        %v1672 = vadd.f32 %v1624, %v1656
        %v1673 = vadd.f32 %v1625, %v1657
        %v1674 = vadd.f32 %v1626, %v1658
        %v1675 = vadd.f32 %v1627, %v1659
        %v1676 = vadd.f32 %v1628, %v1660
        %v1677 = vadd.f32 %v1629, %v1661
        %v1678 = vadd.f32 %v1630, %v1662
        %v1679 = vmax.f32 %v1663, 0.0
        %v1680 = vmax.f32 %v1664, 0.0
        %v1681 = vmax.f32 %v1665, 0.0
        %v1682 = vmax.f32 %v1666, 0.0
        %v1683 = vmax.f32 %v1667, 0.0
        %v1684 = vmax.f32 %v1668, 0.0
        %v1685 = vmax.f32 %v1669, 0.0
        %v1686 = vmax.f32 %v1670, 0.0
        %v1687 = vmax.f32 %v1671, 0.0
        %v1688 = vmax.f32 %v1672, 0.0
        %v1689 = vmax.f32 %v1673, 0.0
        %v1690 = vmax.f32 %v1674, 0.0
        %v1691 = vmax.f32 %v1675, 0.0
        %v1692 = vmax.f32 %v1676, 0.0
        %v1693 = vmax.f32 %v1677, 0.0
        %v1694 = vmax.f32 %v1678, 0.0
        %s1695 = scalar_lea.vmem %s292, 128 [#allocation11]
        %1696 = vst [vmem:[%s1695] sm:$0xff] %v1679
        %1697 = vst [vmem:[%s1695 + $0x8] sm:$0xff] %v1680
        %1698 = vst [vmem:[%s1695 + $0x10] sm:$0xff] %v1681
        %1699 = vst [vmem:[%s1695 + $0x18] sm:$0xff] %v1682
        %1700 = vst [vmem:[%s1695 + $0x20] sm:$0xff] %v1683
        %1701 = vst [vmem:[%s1695 + $0x28] sm:$0xff] %v1684
        %1702 = vst [vmem:[%s1695 + $0x30] sm:$0xff] %v1685
        %1703 = vst [vmem:[%s1695 + $0x38] sm:$0xff] %v1686
        %1704 = vst [vmem:[%s1695 + $0x40] sm:$0xff] %v1687
        %1705 = vst [vmem:[%s1695 + $0x48] sm:$0xff] %v1688
        %1706 = vst [vmem:[%s1695 + $0x50] sm:$0xff] %v1689
        %1707 = vst [vmem:[%s1695 + $0x58] sm:$0xff] %v1690
        %1708 = vst [vmem:[%s1695 + $0x60] sm:$0xff] %v1691
        %1709 = vst [vmem:[%s1695 + $0x68] sm:$0xff] %v1692
        %1710 = vst [vmem:[%s1695 + $0x70] sm:$0xff] %v1693
        %1711 = vst [vmem:[%s1695 + $0x78] sm:$0xff] %v1694
        %s1712 = sand.u32 %s142, 1
        %s1713 = scalar_lea.sflag [#allocation5], %s1712
        %s1714 = sand.u32 %s142, 1
        %s1715 = smul.addr %s1714, 256
        %s1716 = scalar_lea.vmem [#allocation11], %s1715
        // Predicated region
        $region57: #{lightconv_forward.1} parent=39 // pred_check
          %p1717 = pneg %p152
        $region58: #{lightconv_forward.1} parent=39 // pred_check_branch
          %1719 = sbr.rel (%p1717) target = $region60
        $region59: #{lightconv_forward.1} parent=39 // pred_region
          %1721 = vsyncadd %s1713, 0
          %s1722 = smul.addr %s24, 32
          %s1723 = smul.addr %s1722, 8
          %s1724 = scalar_lea.hbm %s5, %s1723
          %s1725 = sshll.u32 %s1716, 4
          %s1726 = int_to_ptr.vmem [resolvable:$true] %s1725
          %s1727 = sshll.u32 %s1724, 4
          %s1728 = int_to_ptr.hbm [resolvable:$true] %s1727
          %1733 = dma.vmem_to_hbm [thread:$0]  %s1726, 4096, %s1728, %s1713, 128, 128, 8
        $region60: #{lightconv_forward.1} parent=39 // pred_fallthru
          _
      $region40: #{lightconv_forward.1} parent=5 // pred_fallthru
        _
      %p1734 = scmp.le.s32.totalorder 2, %s19
      // Predicated region
      $region61: #{lightconv_forward.1} parent=5 // pred_check
        %p1735 = pneg %p1734
      $region62: #{lightconv_forward.1} parent=5 // pred_check_branch
        %1737 = sbr.rel (%p1735) target = $region64
      $region63: #{lightconv_forward.1} parent=5 // pred_region
        %s1738 = ssub.s32 %s19, 2
        // Predicated region
        $region65: #{lightconv_forward.1} parent=63 // pred_check
          %p1739 = pneg %p158
        $region66: #{lightconv_forward.1} parent=63 // pred_check_branch
          %1741 = sbr.rel (%p1739) target = $region68
        $region67: #{lightconv_forward.1} parent=63 // pred_region
          %s1742 = sand.u32 %s143, 1
          %s1743 = scalar_lea.sflag [#allocation5], %s1742
          %s1744 = sand.u32 %s143, 1
          %s1745 = smul.addr %s1744, 256
          %s1746 = scalar_lea.vmem [#allocation11], %s1745
          %1748 = dma.done %s1743, 4096
        $region68: #{lightconv_forward.1} parent=63 // pred_fallthru
          _
      $region64: #{lightconv_forward.1} parent=5 // pred_fallthru
        _
    $region6: #{lightconv_forward.1} parent=1 // loop_footer
      %s23 = sadd.s32 1, %s19
    $region7: #{lightconv_forward.1} parent=1 // loop_footer_branch
      %18 = sbr.rel target = $region3
    $region8: #{lightconv_forward.1} parent=1 // loop_exit
      _
    %1749 = vsyncpa [#allocation4], 1
    %s1750 = scalar_lea.sflag [#allocation4], 1
    %1751 = vsyncpa %s1750, 1
    %1752 = vsyncpa [#allocation7], 1
    %1753 = vsyncpa [#allocation10], 1
    %1754 = vsyncpa [#allocation5], 1
    %s1755 = scalar_lea.sflag [#allocation5], 1
    %1756 = vsyncpa %s1755, 1

</llo_original>
